<compile_context>
chip_gen: v5e
topology: v5e:2x2
jax: 0.10.0
libtpu: 0.0.40
codegen_flags: <defaults>
</compile_context>

<pallas_src>
import jax
import jax.numpy as jnp
from jax.experimental import pallas as pl
from jax.experimental.pallas import tpu as pltpu  # noqa: F401  (kept for TPU-specific tuning)


def se_kernel(x_ref, w1e_ref, w2e_ref, o_ref):
    # x_ref / o_ref: (C*B, HW) ; w1e_ref: (Cr*B, C*B) ; w2e_ref: (C*B, Cr*B)
    x = x_ref[...].astype(jnp.float32)                                   # (CB, HW)
    # Squeeze: global average pool over the spatial (lane) axis.
    y = jnp.mean(x, axis=-1, keepdims=True)                              # (CB, 1)
    # Excitation: fc1 -> relu -> fc2 -> sigmoid, batched over B via the
    # kron-expanded weights (keeps the flattened (C*B,) orientation, no relayout).
    h = jnp.dot(w1e_ref[...], y, preferred_element_type=jnp.float32)     # (CrB, 1)
    h = jnp.maximum(h, 0.0)
    z = jnp.dot(w2e_ref[...], h, preferred_element_type=jnp.float32)     # (CB, 1)
    s = 1.0 / (1.0 + jnp.exp(-z))                                        # sigmoid (exp on EUP)
    # Scale: lane-broadcast of the per-row gate; full-width lane-dense store.
    o_ref[...] = (x * s).astype(o_ref.dtype)


@jax.jit
def se_layer(x5, w1, w2):
    """x5: (1, C, B, H, W). w1: (Cr, C) torch layout. w2: (C, Cr) torch layout."""
    _, C, B, H, W = x5.shape
    Cr = w1.shape[0]
    HW = H * W
    CB = C * B
    CrB = Cr * B

    # Free, contiguous reshape of the native (C, B, H, W) layout -- zero transposes.
    x2d = x5[0].reshape(CB, HW)

    # Expand the torch Linear weights so the FCs act directly on the flattened
    # (C*B,) pooled column: kron(w, I_B)[r*B+b, c*B+b'] = w[r, c] * delta(b, b').
    eye_b = jnp.eye(B, dtype=jnp.float32)
    w1e = jnp.kron(jnp.asarray(w1, jnp.float32), eye_b)                  # (Cr*B, C*B)
    w2e = jnp.kron(jnp.asarray(w2, jnp.float32), eye_b)                  # (C*B, Cr*B)

    itemsize = jnp.dtype(x2d.dtype).itemsize
    cost = pl.CostEstimate(
        flops=2 * CB * HW + 2 * CrB * CB + 2 * CB * CrB,
        transcendentals=CB,
        bytes_accessed=2 * CB * HW * itemsize + (CrB * CB + CB * CrB) * 4,
    )

    # Single block: the whole activation (64 x 256 f32 = 64 KiB here) fits easily
    # in VMEM on v5e/v6e/v7x.
    # TODO(synk): at production SE shapes, add a grid over the C*B row axis with
    # dimension_semantics=("parallel",) so v7x's second TensorCore gets half the rows,
    # and re-derive the block size against v7x's 64 MiB VMEM.
    out2d = pl.pallas_call(
        se_kernel,
        out_shape=jax.ShapeDtypeStruct((CB, HW), x2d.dtype),
        in_specs=[
            pl.BlockSpec((CB, HW), lambda: (0, 0)),
            pl.BlockSpec((CrB, CB), lambda: (0, 0)),
            pl.BlockSpec((CB, CrB), lambda: (0, 0)),
        ],
        out_specs=pl.BlockSpec((CB, HW), lambda: (0, 0)),
        input_output_aliases={0: 0},   # output reuses the activation buffer
        cost_estimate=cost,
    )(x2d, w1e, w2e)

    # Free reshape straight back to the module's output layout (1, C, B, H, W).
    return out2d.reshape(1, C, B, H, W)


def se_layer_ref(x5, w1, w2):
    """Pure-JAX reference replicating the PyTorch forward."""
    x = jnp.transpose(x5[0], (1, 0, 2, 3)).astype(jnp.float32)   # (B, C, H, W)
    y = jnp.mean(x, axis=(2, 3))                                  # (B, C)
    y = jnp.maximum(y @ jnp.asarray(w1, jnp.float32).T, 0.0)
    y = jax.nn.sigmoid(y @ jnp.asarray(w2, jnp.float32).T)
    out = x * y[:, :, None, None]
    return jnp.transpose(out, (1, 0, 2, 3))[None]


if __name__ == "__main__":
    # Shapes consistent with the module: channel=32, reduction=16 -> hidden=2.
    # (x.squeeze() in the torch module only drops the leading 1 since B,H,W > 1.)
    C, B, H, W = 32, 2, 16, 16
    reduction = 16
    Cr = C // reduction

    key = jax.random.PRNGKey(0)
    kx, k1, k2 = jax.random.split(key, 3)
    x5 = jax.random.normal(kx, (1, C, B, H, W), dtype=jnp.float32)
    # Deterministic "kaiming-like" init for the two bias-free Linear layers.
    w1 = jax.random.normal(k1, (Cr, C), dtype=jnp.float32) * (1.0 / jnp.sqrt(C))
    w2 = jax.random.normal(k2, (C, Cr), dtype=jnp.float32) * (1.0 / jnp.sqrt(Cr))

    out = jax.block_until_ready(se_layer(x5, w1, w2))
    ref = se_layer_ref(x5, w1, w2)

    assert out.shape == (1, C, B, H, W), out.shape
    assert jnp.allclose(out, ref, atol=1e-5, rtol=1e-5), "mismatch vs reference"

    print("KERNEL_OK")
</pallas_src>

<mosaic_0001>
module attributes {stable_mosaic.version = 11 : i64} {
  func.func @se_kernel(%arg0: memref<64x256xf32, #tpu.memory_space<vmem>>, %arg1: memref<4x64xf32, #tpu.memory_space<vmem>>, %arg2: memref<64x4xf32, #tpu.memory_space<vmem>>, %arg3: memref<64x256xf32, #tpu.memory_space<vmem>>) attributes {dimension_semantics = [], scalar_prefetch = 0 : i64, scratch_operands = 0 : i64, tpu.core_type = #tpu.core_type<tc>} {
    %c0 = arith.constant 0 : index
    %c0_0 = arith.constant 0 : index
    %0 = vector.load %arg0[%c0, %c0_0] : memref<64x256xf32, #tpu.memory_space<vmem>>, vector<64x256xf32>
    %cst = arith.constant dense<0.000000e+00> : vector<64xf32>
    %1 = vector.multi_reduction <add>, %0, %cst [1] : vector<64x256xf32> to vector<64xf32>
    %2 = vector.shape_cast %1 : vector<64xf32> to vector<64x1xf32>
    %cst_1 = arith.constant 2.560000e+02 : f32
    %3 = vector.broadcast %cst_1 : f32 to vector<64x1xf32>
    %4 = arith.divf %2, %3 : vector<64x1xf32>
    %c0_2 = arith.constant 0 : index
    %c0_3 = arith.constant 0 : index
    %5 = vector.load %arg1[%c0_2, %c0_3] : memref<4x64xf32, #tpu.memory_space<vmem>>, vector<4x64xf32>
    %cst_4 = arith.constant dense<0.000000e+00> : vector<4x1xf32>
    %6 = tpu.matmul %5, %4, %cst_4 {dimension_numbers = #tpu.dot_dimension_numbers<[1], [0], [0], [1], [0, 0, 1, 1], [], []>} : vector<4x64xf32>, vector<64x1xf32>, vector<4x1xf32> -> vector<4x1xf32>
    %cst_5 = arith.constant 0.000000e+00 : f32
    %7 = vector.broadcast %cst_5 : f32 to vector<4x1xf32>
    %8 = arith.maximumf %6, %7 : vector<4x1xf32>
    %c0_6 = arith.constant 0 : index
    %c0_7 = arith.constant 0 : index
    %9 = vector.load %arg2[%c0_6, %c0_7] : memref<64x4xf32, #tpu.memory_space<vmem>>, vector<64x4xf32>
    %cst_8 = arith.constant dense<0.000000e+00> : vector<64x1xf32>
    %10 = tpu.matmul %9, %8, %cst_8 {dimension_numbers = #tpu.dot_dimension_numbers<[1], [0], [0], [1], [0, 0, 1, 1], [], []>} : vector<64x4xf32>, vector<4x1xf32>, vector<64x1xf32> -> vector<64x1xf32>
    %cst_9 = arith.constant 0.000000e+00 : f32
    %11 = vector.broadcast %cst_9 : f32 to vector<64x1xf32>
    %12 = arith.subf %11, %10 : vector<64x1xf32>
    %13 = math.exp %12 : vector<64x1xf32>
    %cst_10 = arith.constant 1.000000e+00 : f32
    %14 = vector.broadcast %cst_10 : f32 to vector<64x1xf32>
    %15 = arith.addf %14, %13 : vector<64x1xf32>
    %cst_11 = arith.constant 1.000000e+00 : f32
    %16 = vector.broadcast %cst_11 : f32 to vector<64x1xf32>
    %17 = arith.divf %16, %15 : vector<64x1xf32>
    %18 = vector.broadcast %17 : vector<64x1xf32> to vector<64x256xf32>
    %19 = arith.mulf %0, %18 : vector<64x256xf32>
    %c0_12 = arith.constant 0 : index
    %c0_13 = arith.constant 0 : index
    %20 = vector.load %arg3[%c0_12, %c0_13] : memref<64x256xf32, #tpu.memory_space<vmem>>, vector<64x256xf32>
    tpu.vector_store %arg3[%c0_12, %c0_13], %19 {strides = array<i32>} : memref<64x256xf32, #tpu.memory_space<vmem>>, vector<64x256xf32>,
    return
  }
}

</mosaic_0001>

<llo_original>
// kernel: squeeze.1
$region0: #{squeeze.1}
  %s0 = inlined_call_operand.vmem [shape: f32[1,32,2,16,16], index: 0, kind: input, shape index: {}]
  %s1 = inlined_call_operand.vmem [shape: f32[64,256], index: 1, kind: output, shape index: {}]
  %v2 = vld [vmem:[%s0] ss:$8 sm:$0xf]
  %v3 = vld [vmem:[%s0] ss:$8 sm:$0xf0]
  %vm4 = vcmask 1047556
  %v5 = vsel %vm4, %v3, %v2
  %vm6 = vcmask 130048
  %7 = vst.msk [vmem:[%s1] ss:$8 sm:$0x3] %vm6, %v5
  %s8 = scalar_lea.vmem %s1, 4294967281
  %9 = vst.msk [vmem:[%s8] ss:$8 sm:$0xc] %vm6, %v5
  %s10 = scalar_lea.vmem %s1, 4294967266
  %11 = vst.msk [vmem:[%s10] ss:$8 sm:$0x30] %vm6, %v5
  %s12 = scalar_lea.vmem %s1, 4294967251
  %13 = vst.msk [vmem:[%s12] ss:$8 sm:$0xc0] %vm6, %v5
  %s14 = scalar_lea.vmem %s0, 64
  %v15 = vld [vmem:[%s14] ss:$8 sm:$0xf]
  %s16 = scalar_lea.vmem %s0, 64
  %v17 = vld [vmem:[%s16] ss:$8 sm:$0xf0]
  %vm18 = vcmask 1047556
  %v19 = vsel %vm18, %v17, %v15
  %vm20 = vcmask 130048
  %s21 = scalar_lea.vmem %s1, 4
  %22 = vst.msk [vmem:[%s21] ss:$8 sm:$0x3] %vm20, %v19
  %s23 = scalar_lea.vmem %s1, 4294967285
  %24 = vst.msk [vmem:[%s23] ss:$8 sm:$0xc] %vm20, %v19
  %s25 = scalar_lea.vmem %s1, 4294967270
  %26 = vst.msk [vmem:[%s25] ss:$8 sm:$0x30] %vm20, %v19
  %s27 = scalar_lea.vmem %s1, 4294967255
  %28 = vst.msk [vmem:[%s27] ss:$8 sm:$0xc0] %vm20, %v19
  %s29 = scalar_lea.vmem %s0, 128
  %v30 = vld [vmem:[%s29] ss:$8 sm:$0xf]
  %s31 = scalar_lea.vmem %s0, 128
  %v32 = vld [vmem:[%s31] ss:$8 sm:$0xf0]
  %vm33 = vcmask 1047556
  %v34 = vsel %vm33, %v32, %v30
  %vm35 = vcmask 130048
  %s36 = scalar_lea.vmem %s1, 16
  %37 = vst.msk [vmem:[%s36] ss:$8 sm:$0x3] %vm35, %v34
  %s38 = scalar_lea.vmem %s1, 1
  %39 = vst.msk [vmem:[%s38] ss:$8 sm:$0xc] %vm35, %v34
  %s40 = scalar_lea.vmem %s1, 4294967282
  %41 = vst.msk [vmem:[%s40] ss:$8 sm:$0x30] %vm35, %v34
  %s42 = scalar_lea.vmem %s1, 4294967267
  %43 = vst.msk [vmem:[%s42] ss:$8 sm:$0xc0] %vm35, %v34
  %s44 = scalar_lea.vmem %s0, 192
  %v45 = vld [vmem:[%s44] ss:$8 sm:$0xf]
  %s46 = scalar_lea.vmem %s0, 192
  %v47 = vld [vmem:[%s46] ss:$8 sm:$0xf0]
  %vm48 = vcmask 1047556
  %v49 = vsel %vm48, %v47, %v45
  %vm50 = vcmask 130048
  %s51 = scalar_lea.vmem %s1, 20
  %52 = vst.msk [vmem:[%s51] ss:$8 sm:$0x3] %vm50, %v49
  %s53 = scalar_lea.vmem %s1, 5
  %54 = vst.msk [vmem:[%s53] ss:$8 sm:$0xc] %vm50, %v49
  %s55 = scalar_lea.vmem %s1, 4294967286
  %56 = vst.msk [vmem:[%s55] ss:$8 sm:$0x30] %vm50, %v49
  %s57 = scalar_lea.vmem %s1, 4294967271
  %58 = vst.msk [vmem:[%s57] ss:$8 sm:$0xc0] %vm50, %v49
  %s59 = scalar_lea.vmem %s0, 256
  %v60 = vld [vmem:[%s59] ss:$8 sm:$0xf]
  %s61 = scalar_lea.vmem %s0, 256
  %v62 = vld [vmem:[%s61] ss:$8 sm:$0xf0]
  %vm63 = vcmask 1047556
  %v64 = vsel %vm63, %v62, %v60
  %vm65 = vcmask 130048
  %s66 = scalar_lea.vmem %s1, 32
  %67 = vst.msk [vmem:[%s66] ss:$8 sm:$0x3] %vm65, %v64
  %s68 = scalar_lea.vmem %s1, 17
  %69 = vst.msk [vmem:[%s68] ss:$8 sm:$0xc] %vm65, %v64
  %s70 = scalar_lea.vmem %s1, 2
  %71 = vst.msk [vmem:[%s70] ss:$8 sm:$0x30] %vm65, %v64
  %s72 = scalar_lea.vmem %s1, 4294967283
  %73 = vst.msk [vmem:[%s72] ss:$8 sm:$0xc0] %vm65, %v64
  %s74 = scalar_lea.vmem %s0, 320
  %v75 = vld [vmem:[%s74] ss:$8 sm:$0xf]
  %s76 = scalar_lea.vmem %s0, 320
  %v77 = vld [vmem:[%s76] ss:$8 sm:$0xf0]
  %vm78 = vcmask 1047556
  %v79 = vsel %vm78, %v77, %v75
  %vm80 = vcmask 130048
  %s81 = scalar_lea.vmem %s1, 36
  %82 = vst.msk [vmem:[%s81] ss:$8 sm:$0x3] %vm80, %v79
  %s83 = scalar_lea.vmem %s1, 21
  %84 = vst.msk [vmem:[%s83] ss:$8 sm:$0xc] %vm80, %v79
  %s85 = scalar_lea.vmem %s1, 6
  %86 = vst.msk [vmem:[%s85] ss:$8 sm:$0x30] %vm80, %v79
  %s87 = scalar_lea.vmem %s1, 4294967287
  %88 = vst.msk [vmem:[%s87] ss:$8 sm:$0xc0] %vm80, %v79
  %s89 = scalar_lea.vmem %s0, 384
  %v90 = vld [vmem:[%s89] ss:$8 sm:$0xf]
  %s91 = scalar_lea.vmem %s0, 384
  %v92 = vld [vmem:[%s91] ss:$8 sm:$0xf0]
  %vm93 = vcmask 1047556
  %v94 = vsel %vm93, %v92, %v90
  %vm95 = vcmask 130048
  %s96 = scalar_lea.vmem %s1, 48
  %97 = vst.msk [vmem:[%s96] ss:$8 sm:$0x3] %vm95, %v94
  %s98 = scalar_lea.vmem %s1, 33
  %99 = vst.msk [vmem:[%s98] ss:$8 sm:$0xc] %vm95, %v94
  %s100 = scalar_lea.vmem %s1, 18
  %101 = vst.msk [vmem:[%s100] ss:$8 sm:$0x30] %vm95, %v94
  %s102 = scalar_lea.vmem %s1, 3
  %103 = vst.msk [vmem:[%s102] ss:$8 sm:$0xc0] %vm95, %v94
  %s104 = scalar_lea.vmem %s0, 448
  %v105 = vld [vmem:[%s104] ss:$8 sm:$0xf]
  %s106 = scalar_lea.vmem %s0, 448
  %v107 = vld [vmem:[%s106] ss:$8 sm:$0xf0]
  %vm108 = vcmask 1047556
  %v109 = vsel %vm108, %v107, %v105
  %vm110 = vcmask 130048
  %s111 = scalar_lea.vmem %s1, 52
  %112 = vst.msk [vmem:[%s111] ss:$8 sm:$0x3] %vm110, %v109
  %s113 = scalar_lea.vmem %s1, 37
  %114 = vst.msk [vmem:[%s113] ss:$8 sm:$0xc] %vm110, %v109
  %s115 = scalar_lea.vmem %s1, 22
  %116 = vst.msk [vmem:[%s115] ss:$8 sm:$0x30] %vm110, %v109
  %s117 = scalar_lea.vmem %s1, 7
  %118 = vst.msk [vmem:[%s117] ss:$8 sm:$0xc0] %vm110, %v109
  %s119 = scalar_lea.vmem %s0, 512
  %v120 = vld [vmem:[%s119] ss:$8 sm:$0xf]
  %s121 = scalar_lea.vmem %s0, 512
  %v122 = vld [vmem:[%s121] ss:$8 sm:$0xf0]
  %vm123 = vcmask 1047556
  %v124 = vsel %vm123, %v122, %v120
  %vm125 = vcmask 130048
  %s126 = scalar_lea.vmem %s1, 64
  %127 = vst.msk [vmem:[%s126] ss:$8 sm:$0x3] %vm125, %v124
  %s128 = scalar_lea.vmem %s1, 49
  %129 = vst.msk [vmem:[%s128] ss:$8 sm:$0xc] %vm125, %v124
  %s130 = scalar_lea.vmem %s1, 34
  %131 = vst.msk [vmem:[%s130] ss:$8 sm:$0x30] %vm125, %v124
  %s132 = scalar_lea.vmem %s1, 19
  %133 = vst.msk [vmem:[%s132] ss:$8 sm:$0xc0] %vm125, %v124
  %s134 = scalar_lea.vmem %s0, 576
  %v135 = vld [vmem:[%s134] ss:$8 sm:$0xf]
  %s136 = scalar_lea.vmem %s0, 576
  %v137 = vld [vmem:[%s136] ss:$8 sm:$0xf0]
  %vm138 = vcmask 1047556
  %v139 = vsel %vm138, %v137, %v135
  %vm140 = vcmask 130048
  %s141 = scalar_lea.vmem %s1, 68
  %142 = vst.msk [vmem:[%s141] ss:$8 sm:$0x3] %vm140, %v139
  %s143 = scalar_lea.vmem %s1, 53
  %144 = vst.msk [vmem:[%s143] ss:$8 sm:$0xc] %vm140, %v139
  %s145 = scalar_lea.vmem %s1, 38
  %146 = vst.msk [vmem:[%s145] ss:$8 sm:$0x30] %vm140, %v139
  %s147 = scalar_lea.vmem %s1, 23
  %148 = vst.msk [vmem:[%s147] ss:$8 sm:$0xc0] %vm140, %v139
  %s149 = scalar_lea.vmem %s0, 640
  %v150 = vld [vmem:[%s149] ss:$8 sm:$0xf]
  %s151 = scalar_lea.vmem %s0, 640
  %v152 = vld [vmem:[%s151] ss:$8 sm:$0xf0]
  %vm153 = vcmask 1047556
  %v154 = vsel %vm153, %v152, %v150
  %vm155 = vcmask 130048
  %s156 = scalar_lea.vmem %s1, 80
  %157 = vst.msk [vmem:[%s156] ss:$8 sm:$0x3] %vm155, %v154
  %s158 = scalar_lea.vmem %s1, 65
  %159 = vst.msk [vmem:[%s158] ss:$8 sm:$0xc] %vm155, %v154
  %s160 = scalar_lea.vmem %s1, 50
  %161 = vst.msk [vmem:[%s160] ss:$8 sm:$0x30] %vm155, %v154
  %s162 = scalar_lea.vmem %s1, 35
  %163 = vst.msk [vmem:[%s162] ss:$8 sm:$0xc0] %vm155, %v154
  %s164 = scalar_lea.vmem %s0, 704
  %v165 = vld [vmem:[%s164] ss:$8 sm:$0xf]
  %s166 = scalar_lea.vmem %s0, 704
  %v167 = vld [vmem:[%s166] ss:$8 sm:$0xf0]
  %vm168 = vcmask 1047556
  %v169 = vsel %vm168, %v167, %v165
  %vm170 = vcmask 130048
  %s171 = scalar_lea.vmem %s1, 84
  %172 = vst.msk [vmem:[%s171] ss:$8 sm:$0x3] %vm170, %v169
  %s173 = scalar_lea.vmem %s1, 69
  %174 = vst.msk [vmem:[%s173] ss:$8 sm:$0xc] %vm170, %v169
  %s175 = scalar_lea.vmem %s1, 54
  %176 = vst.msk [vmem:[%s175] ss:$8 sm:$0x30] %vm170, %v169
  %s177 = scalar_lea.vmem %s1, 39
  %178 = vst.msk [vmem:[%s177] ss:$8 sm:$0xc0] %vm170, %v169
  %s179 = scalar_lea.vmem %s0, 768
  %v180 = vld [vmem:[%s179] ss:$8 sm:$0xf]
  %s181 = scalar_lea.vmem %s0, 768
  %v182 = vld [vmem:[%s181] ss:$8 sm:$0xf0]
  %vm183 = vcmask 1047556
  %v184 = vsel %vm183, %v182, %v180
  %vm185 = vcmask 130048
  %s186 = scalar_lea.vmem %s1, 96
  %187 = vst.msk [vmem:[%s186] ss:$8 sm:$0x3] %vm185, %v184
  %s188 = scalar_lea.vmem %s1, 81
  %189 = vst.msk [vmem:[%s188] ss:$8 sm:$0xc] %vm185, %v184
  %s190 = scalar_lea.vmem %s1, 66
  %191 = vst.msk [vmem:[%s190] ss:$8 sm:$0x30] %vm185, %v184
  %s192 = scalar_lea.vmem %s1, 51
  %193 = vst.msk [vmem:[%s192] ss:$8 sm:$0xc0] %vm185, %v184
  %s194 = scalar_lea.vmem %s0, 832
  %v195 = vld [vmem:[%s194] ss:$8 sm:$0xf]
  %s196 = scalar_lea.vmem %s0, 832
  %v197 = vld [vmem:[%s196] ss:$8 sm:$0xf0]
  %vm198 = vcmask 1047556
  %v199 = vsel %vm198, %v197, %v195
  %vm200 = vcmask 130048
  %s201 = scalar_lea.vmem %s1, 100
  %202 = vst.msk [vmem:[%s201] ss:$8 sm:$0x3] %vm200, %v199
  %s203 = scalar_lea.vmem %s1, 85
  %204 = vst.msk [vmem:[%s203] ss:$8 sm:$0xc] %vm200, %v199
  %s205 = scalar_lea.vmem %s1, 70
  %206 = vst.msk [vmem:[%s205] ss:$8 sm:$0x30] %vm200, %v199
  %s207 = scalar_lea.vmem %s1, 55
  %208 = vst.msk [vmem:[%s207] ss:$8 sm:$0xc0] %vm200, %v199
  %s209 = scalar_lea.vmem %s0, 896
  %v210 = vld [vmem:[%s209] ss:$8 sm:$0xf]
  %s211 = scalar_lea.vmem %s0, 896
  %v212 = vld [vmem:[%s211] ss:$8 sm:$0xf0]
  %vm213 = vcmask 1047556
  %v214 = vsel %vm213, %v212, %v210
  %vm215 = vcmask 130048
  %s216 = scalar_lea.vmem %s1, 112
  %217 = vst.msk [vmem:[%s216] ss:$8 sm:$0x3] %vm215, %v214
  %s218 = scalar_lea.vmem %s1, 97
  %219 = vst.msk [vmem:[%s218] ss:$8 sm:$0xc] %vm215, %v214
  %s220 = scalar_lea.vmem %s1, 82
  %221 = vst.msk [vmem:[%s220] ss:$8 sm:$0x30] %vm215, %v214
  %s222 = scalar_lea.vmem %s1, 67
  %223 = vst.msk [vmem:[%s222] ss:$8 sm:$0xc0] %vm215, %v214
  %s224 = scalar_lea.vmem %s0, 960
  %v225 = vld [vmem:[%s224] ss:$8 sm:$0xf]
  %s226 = scalar_lea.vmem %s0, 960
  %v227 = vld [vmem:[%s226] ss:$8 sm:$0xf0]
  %vm228 = vcmask 1047556
  %v229 = vsel %vm228, %v227, %v225
  %vm230 = vcmask 130048
  %s231 = scalar_lea.vmem %s1, 116
  %232 = vst.msk [vmem:[%s231] ss:$8 sm:$0x3] %vm230, %v229
  %s233 = scalar_lea.vmem %s1, 101
  %234 = vst.msk [vmem:[%s233] ss:$8 sm:$0xc] %vm230, %v229
  %s235 = scalar_lea.vmem %s1, 86
  %236 = vst.msk [vmem:[%s235] ss:$8 sm:$0x30] %vm230, %v229
  %s237 = scalar_lea.vmem %s1, 71
  %238 = vst.msk [vmem:[%s237] ss:$8 sm:$0xc0] %vm230, %v229
  %s239 = scalar_lea.vmem %s0, 7
  %s240 = smov 3
  %v241 = vld [vmem:[%s239] ss:$16 sm:%s240]
  %s242 = scalar_lea.vmem %s0, 7
  %s243 = smov 12
  %v244 = vld [vmem:[%s242] ss:$16 sm:%s243]
  %vm245 = vcmask 1043458
  %v246 = vsel %vm245, %v244, %v241
  %s247 = scalar_lea.vmem %s0, 7
  %s248 = smov 48
  %v249 = vld [vmem:[%s247] ss:$16 sm:%s248]
  %vm250 = vcmask 1045508
  %v251 = vsel %vm250, %v249, %v246
  %s252 = scalar_lea.vmem %s0, 7
  %s253 = smov 192
  %v254 = vld [vmem:[%s252] ss:$16 sm:%s253]
  %vm255 = vcmask 1047558
  %v256 = vsel %vm255, %v254, %v251
  %257 = vrot.lane.b32.xlu0 %v256, 112
  %v258 = vpop.permute.xlu0 %257
  %vm259 = vcmask 1048448
  %260 = vst.msk [vmem:[%s1] sm:$0xff] %vm259, %v258
  %s261 = scalar_lea.vmem %s0, 263
  %s262 = smov 3
  %v263 = vld [vmem:[%s261] ss:$16 sm:%s262]
  %s264 = scalar_lea.vmem %s0, 263
  %s265 = smov 12
  %v266 = vld [vmem:[%s264] ss:$16 sm:%s265]
  %vm267 = vcmask 1043458
  %v268 = vsel %vm267, %v266, %v263
  %s269 = scalar_lea.vmem %s0, 263
  %s270 = smov 48
  %v271 = vld [vmem:[%s269] ss:$16 sm:%s270]
  %vm272 = vcmask 1045508
  %v273 = vsel %vm272, %v271, %v268
  %s274 = scalar_lea.vmem %s0, 263
  %s275 = smov 192
  %v276 = vld [vmem:[%s274] ss:$16 sm:%s275]
  %vm277 = vcmask 1047558
  %v278 = vsel %vm277, %v276, %v273
  %279 = vrot.lane.b32.xlu0 %v278, 112
  %v280 = vpop.permute.xlu0 %279
  %vm281 = vcmask 1048448
  %s282 = scalar_lea.vmem %s1, 32
  %283 = vst.msk [vmem:[%s282] sm:$0xff] %vm281, %v280
  %s284 = scalar_lea.vmem %s0, 519
  %s285 = smov 3
  %v286 = vld [vmem:[%s284] ss:$16 sm:%s285]
  %s287 = scalar_lea.vmem %s0, 519
  %s288 = smov 12
  %v289 = vld [vmem:[%s287] ss:$16 sm:%s288]
  %vm290 = vcmask 1043458
  %v291 = vsel %vm290, %v289, %v286
  %s292 = scalar_lea.vmem %s0, 519
  %s293 = smov 48
  %v294 = vld [vmem:[%s292] ss:$16 sm:%s293]
  %vm295 = vcmask 1045508
  %v296 = vsel %vm295, %v294, %v291
  %s297 = scalar_lea.vmem %s0, 519
  %s298 = smov 192
  %v299 = vld [vmem:[%s297] ss:$16 sm:%s298]
  %vm300 = vcmask 1047558
  %v301 = vsel %vm300, %v299, %v296
  %302 = vrot.lane.b32.xlu0 %v301, 112
  %v303 = vpop.permute.xlu0 %302
  %vm304 = vcmask 1048448
  %s305 = scalar_lea.vmem %s1, 64
  %306 = vst.msk [vmem:[%s305] sm:$0xff] %vm304, %v303
  %s307 = scalar_lea.vmem %s0, 775
  %s308 = smov 3
  %v309 = vld [vmem:[%s307] ss:$16 sm:%s308]
  %s310 = scalar_lea.vmem %s0, 775
  %s311 = smov 12
  %v312 = vld [vmem:[%s310] ss:$16 sm:%s311]
  %vm313 = vcmask 1043458
  %v314 = vsel %vm313, %v312, %v309
  %s315 = scalar_lea.vmem %s0, 775
  %s316 = smov 48
  %v317 = vld [vmem:[%s315] ss:$16 sm:%s316]
  %vm318 = vcmask 1045508
  %v319 = vsel %vm318, %v317, %v314
  %s320 = scalar_lea.vmem %s0, 775
  %s321 = smov 192
  %v322 = vld [vmem:[%s320] ss:$16 sm:%s321]
  %vm323 = vcmask 1047558
  %v324 = vsel %vm323, %v322, %v319
  %325 = vrot.lane.b32.xlu0 %v324, 112
  %v326 = vpop.permute.xlu0 %325
  %vm327 = vcmask 1048448
  %s328 = scalar_lea.vmem %s1, 96
  %329 = vst.msk [vmem:[%s328] sm:$0xff] %vm327, %v326
  %s330 = scalar_lea.vmem %s0, 15
  %s331 = smov 3
  %v332 = vld [vmem:[%s330] ss:$16 sm:%s331]
  %s333 = scalar_lea.vmem %s0, 15
  %s334 = smov 12
  %v335 = vld [vmem:[%s333] ss:$16 sm:%s334]
  %vm336 = vcmask 1043458
  %v337 = vsel %vm336, %v335, %v332
  %s338 = scalar_lea.vmem %s0, 15
  %s339 = smov 48
  %v340 = vld [vmem:[%s338] ss:$16 sm:%s339]
  %vm341 = vcmask 1045508
  %v342 = vsel %vm341, %v340, %v337
  %s343 = scalar_lea.vmem %s0, 15
  %s344 = smov 192
  %v345 = vld [vmem:[%s343] ss:$16 sm:%s344]
  %vm346 = vcmask 1047558
  %v347 = vsel %vm346, %v345, %v342
  %348 = vrot.lane.b32.xlu0 %v347, 112
  %v349 = vpop.permute.xlu0 %348
  %vm350 = vcmask 1048448
  %s351 = scalar_lea.vmem %s1, 8
  %352 = vst.msk [vmem:[%s351] sm:$0xff] %vm350, %v349
  %s353 = scalar_lea.vmem %s0, 271
  %s354 = smov 3
  %v355 = vld [vmem:[%s353] ss:$16 sm:%s354]
  %s356 = scalar_lea.vmem %s0, 271
  %s357 = smov 12
  %v358 = vld [vmem:[%s356] ss:$16 sm:%s357]
  %vm359 = vcmask 1043458
  %v360 = vsel %vm359, %v358, %v355
  %s361 = scalar_lea.vmem %s0, 271
  %s362 = smov 48
  %v363 = vld [vmem:[%s361] ss:$16 sm:%s362]
  %vm364 = vcmask 1045508
  %v365 = vsel %vm364, %v363, %v360
  %s366 = scalar_lea.vmem %s0, 271
  %s367 = smov 192
  %v368 = vld [vmem:[%s366] ss:$16 sm:%s367]
  %vm369 = vcmask 1047558
  %v370 = vsel %vm369, %v368, %v365
  %371 = vrot.lane.b32.xlu0 %v370, 112
  %v372 = vpop.permute.xlu0 %371
  %vm373 = vcmask 1048448
  %s374 = scalar_lea.vmem %s1, 40
  %375 = vst.msk [vmem:[%s374] sm:$0xff] %vm373, %v372
  %s376 = scalar_lea.vmem %s0, 527
  %s377 = smov 3
  %v378 = vld [vmem:[%s376] ss:$16 sm:%s377]
  %s379 = scalar_lea.vmem %s0, 527
  %s380 = smov 12
  %v381 = vld [vmem:[%s379] ss:$16 sm:%s380]
  %vm382 = vcmask 1043458
  %v383 = vsel %vm382, %v381, %v378
  %s384 = scalar_lea.vmem %s0, 527
  %s385 = smov 48
  %v386 = vld [vmem:[%s384] ss:$16 sm:%s385]
  %vm387 = vcmask 1045508
  %v388 = vsel %vm387, %v386, %v383
  %s389 = scalar_lea.vmem %s0, 527
  %s390 = smov 192
  %v391 = vld [vmem:[%s389] ss:$16 sm:%s390]
  %vm392 = vcmask 1047558
  %v393 = vsel %vm392, %v391, %v388
  %394 = vrot.lane.b32.xlu0 %v393, 112
  %v395 = vpop.permute.xlu0 %394
  %vm396 = vcmask 1048448
  %s397 = scalar_lea.vmem %s1, 72
  %398 = vst.msk [vmem:[%s397] sm:$0xff] %vm396, %v395
  %s399 = scalar_lea.vmem %s0, 783
  %s400 = smov 3
  %v401 = vld [vmem:[%s399] ss:$16 sm:%s400]
  %s402 = scalar_lea.vmem %s0, 783
  %s403 = smov 12
  %v404 = vld [vmem:[%s402] ss:$16 sm:%s403]
  %vm405 = vcmask 1043458
  %v406 = vsel %vm405, %v404, %v401
  %s407 = scalar_lea.vmem %s0, 783
  %s408 = smov 48
  %v409 = vld [vmem:[%s407] ss:$16 sm:%s408]
  %vm410 = vcmask 1045508
  %v411 = vsel %vm410, %v409, %v406
  %s412 = scalar_lea.vmem %s0, 783
  %s413 = smov 192
  %v414 = vld [vmem:[%s412] ss:$16 sm:%s413]
  %vm415 = vcmask 1047558
  %v416 = vsel %vm415, %v414, %v411
  %417 = vrot.lane.b32.xlu0 %v416, 112
  %v418 = vpop.permute.xlu0 %417
  %vm419 = vcmask 1048448
  %s420 = scalar_lea.vmem %s1, 104
  %421 = vst.msk [vmem:[%s420] sm:$0xff] %vm419, %v418
  %s422 = scalar_lea.vmem %s0, 135
  %s423 = smov 3
  %v424 = vld [vmem:[%s422] ss:$16 sm:%s423]
  %s425 = scalar_lea.vmem %s0, 135
  %s426 = smov 12
  %v427 = vld [vmem:[%s425] ss:$16 sm:%s426]
  %vm428 = vcmask 1043458
  %v429 = vsel %vm428, %v427, %v424
  %s430 = scalar_lea.vmem %s0, 135
  %s431 = smov 48
  %v432 = vld [vmem:[%s430] ss:$16 sm:%s431]
  %vm433 = vcmask 1045508
  %v434 = vsel %vm433, %v432, %v429
  %s435 = scalar_lea.vmem %s0, 135
  %s436 = smov 192
  %v437 = vld [vmem:[%s435] ss:$16 sm:%s436]
  %vm438 = vcmask 1047558
  %v439 = vsel %vm438, %v437, %v434
  %440 = vrot.lane.b32.xlu0 %v439, 112
  %v441 = vpop.permute.xlu0 %440
  %vm442 = vcmask 1048448
  %s443 = scalar_lea.vmem %s1, 16
  %444 = vst.msk [vmem:[%s443] sm:$0xff] %vm442, %v441
  %s445 = scalar_lea.vmem %s0, 391
  %s446 = smov 3
  %v447 = vld [vmem:[%s445] ss:$16 sm:%s446]
  %s448 = scalar_lea.vmem %s0, 391
  %s449 = smov 12
  %v450 = vld [vmem:[%s448] ss:$16 sm:%s449]
  %vm451 = vcmask 1043458
  %v452 = vsel %vm451, %v450, %v447
  %s453 = scalar_lea.vmem %s0, 391
  %s454 = smov 48
  %v455 = vld [vmem:[%s453] ss:$16 sm:%s454]
  %vm456 = vcmask 1045508
  %v457 = vsel %vm456, %v455, %v452
  %s458 = scalar_lea.vmem %s0, 391
  %s459 = smov 192
  %v460 = vld [vmem:[%s458] ss:$16 sm:%s459]
  %vm461 = vcmask 1047558
  %v462 = vsel %vm461, %v460, %v457
  %463 = vrot.lane.b32.xlu0 %v462, 112
  %v464 = vpop.permute.xlu0 %463
  %vm465 = vcmask 1048448
  %s466 = scalar_lea.vmem %s1, 48
  %467 = vst.msk [vmem:[%s466] sm:$0xff] %vm465, %v464
  %s468 = scalar_lea.vmem %s0, 647
  %s469 = smov 3
  %v470 = vld [vmem:[%s468] ss:$16 sm:%s469]
  %s471 = scalar_lea.vmem %s0, 647
  %s472 = smov 12
  %v473 = vld [vmem:[%s471] ss:$16 sm:%s472]
  %vm474 = vcmask 1043458
  %v475 = vsel %vm474, %v473, %v470
  %s476 = scalar_lea.vmem %s0, 647
  %s477 = smov 48
  %v478 = vld [vmem:[%s476] ss:$16 sm:%s477]
  %vm479 = vcmask 1045508
  %v480 = vsel %vm479, %v478, %v475
  %s481 = scalar_lea.vmem %s0, 647
  %s482 = smov 192
  %v483 = vld [vmem:[%s481] ss:$16 sm:%s482]
  %vm484 = vcmask 1047558
  %v485 = vsel %vm484, %v483, %v480
  %486 = vrot.lane.b32.xlu0 %v485, 112
  %v487 = vpop.permute.xlu0 %486
  %vm488 = vcmask 1048448
  %s489 = scalar_lea.vmem %s1, 80
  %490 = vst.msk [vmem:[%s489] sm:$0xff] %vm488, %v487
  %s491 = scalar_lea.vmem %s0, 903
  %s492 = smov 3
  %v493 = vld [vmem:[%s491] ss:$16 sm:%s492]
  %s494 = scalar_lea.vmem %s0, 903
  %s495 = smov 12
  %v496 = vld [vmem:[%s494] ss:$16 sm:%s495]
  %vm497 = vcmask 1043458
  %v498 = vsel %vm497, %v496, %v493
  %s499 = scalar_lea.vmem %s0, 903
  %s500 = smov 48
  %v501 = vld [vmem:[%s499] ss:$16 sm:%s500]
  %vm502 = vcmask 1045508
  %v503 = vsel %vm502, %v501, %v498
  %s504 = scalar_lea.vmem %s0, 903
  %s505 = smov 192
  %v506 = vld [vmem:[%s504] ss:$16 sm:%s505]
  %vm507 = vcmask 1047558
  %v508 = vsel %vm507, %v506, %v503
  %509 = vrot.lane.b32.xlu0 %v508, 112
  %v510 = vpop.permute.xlu0 %509
  %vm511 = vcmask 1048448
  %s512 = scalar_lea.vmem %s1, 112
  %513 = vst.msk [vmem:[%s512] sm:$0xff] %vm511, %v510
  %s514 = scalar_lea.vmem %s0, 143
  %s515 = smov 3
  %v516 = vld [vmem:[%s514] ss:$16 sm:%s515]
  %s517 = scalar_lea.vmem %s0, 143
  %s518 = smov 12
  %v519 = vld [vmem:[%s517] ss:$16 sm:%s518]
  %vm520 = vcmask 1043458
  %v521 = vsel %vm520, %v519, %v516
  %s522 = scalar_lea.vmem %s0, 143
  %s523 = smov 48
  %v524 = vld [vmem:[%s522] ss:$16 sm:%s523]
  %vm525 = vcmask 1045508
  %v526 = vsel %vm525, %v524, %v521
  %s527 = scalar_lea.vmem %s0, 143
  %s528 = smov 192
  %v529 = vld [vmem:[%s527] ss:$16 sm:%s528]
  %vm530 = vcmask 1047558
  %v531 = vsel %vm530, %v529, %v526
  %532 = vrot.lane.b32.xlu0 %v531, 112
  %v533 = vpop.permute.xlu0 %532
  %vm534 = vcmask 1048448
  %s535 = scalar_lea.vmem %s1, 24
  %536 = vst.msk [vmem:[%s535] sm:$0xff] %vm534, %v533
  %s537 = scalar_lea.vmem %s0, 399
  %s538 = smov 3
  %v539 = vld [vmem:[%s537] ss:$16 sm:%s538]
  %s540 = scalar_lea.vmem %s0, 399
  %s541 = smov 12
  %v542 = vld [vmem:[%s540] ss:$16 sm:%s541]
  %vm543 = vcmask 1043458
  %v544 = vsel %vm543, %v542, %v539
  %s545 = scalar_lea.vmem %s0, 399
  %s546 = smov 48
  %v547 = vld [vmem:[%s545] ss:$16 sm:%s546]
  %vm548 = vcmask 1045508
  %v549 = vsel %vm548, %v547, %v544
  %s550 = scalar_lea.vmem %s0, 399
  %s551 = smov 192
  %v552 = vld [vmem:[%s550] ss:$16 sm:%s551]
  %vm553 = vcmask 1047558
  %v554 = vsel %vm553, %v552, %v549
  %555 = vrot.lane.b32.xlu0 %v554, 112
  %v556 = vpop.permute.xlu0 %555
  %vm557 = vcmask 1048448
  %s558 = scalar_lea.vmem %s1, 56
  %559 = vst.msk [vmem:[%s558] sm:$0xff] %vm557, %v556
  %s560 = scalar_lea.vmem %s0, 655
  %s561 = smov 3
  %v562 = vld [vmem:[%s560] ss:$16 sm:%s561]
  %s563 = scalar_lea.vmem %s0, 655
  %s564 = smov 12
  %v565 = vld [vmem:[%s563] ss:$16 sm:%s564]
  %vm566 = vcmask 1043458
  %v567 = vsel %vm566, %v565, %v562
  %s568 = scalar_lea.vmem %s0, 655
  %s569 = smov 48
  %v570 = vld [vmem:[%s568] ss:$16 sm:%s569]
  %vm571 = vcmask 1045508
  %v572 = vsel %vm571, %v570, %v567
  %s573 = scalar_lea.vmem %s0, 655
  %s574 = smov 192
  %v575 = vld [vmem:[%s573] ss:$16 sm:%s574]
  %vm576 = vcmask 1047558
  %v577 = vsel %vm576, %v575, %v572
  %578 = vrot.lane.b32.xlu0 %v577, 112
  %v579 = vpop.permute.xlu0 %578
  %vm580 = vcmask 1048448
  %s581 = scalar_lea.vmem %s1, 88
  %582 = vst.msk [vmem:[%s581] sm:$0xff] %vm580, %v579
  %s583 = scalar_lea.vmem %s0, 911
  %s584 = smov 3
  %v585 = vld [vmem:[%s583] ss:$16 sm:%s584]
  %s586 = scalar_lea.vmem %s0, 911
  %s587 = smov 12
  %v588 = vld [vmem:[%s586] ss:$16 sm:%s587]
  %vm589 = vcmask 1043458
  %v590 = vsel %vm589, %v588, %v585
  %s591 = scalar_lea.vmem %s0, 911
  %s592 = smov 48
  %v593 = vld [vmem:[%s591] ss:$16 sm:%s592]
  %vm594 = vcmask 1045508
  %v595 = vsel %vm594, %v593, %v590
  %s596 = scalar_lea.vmem %s0, 911
  %s597 = smov 192
  %v598 = vld [vmem:[%s596] ss:$16 sm:%s597]
  %vm599 = vcmask 1047558
  %v600 = vsel %vm599, %v598, %v595
  %601 = vrot.lane.b32.xlu0 %v600, 112
  %v602 = vpop.permute.xlu0 %601
  %vm603 = vcmask 1048448
  %s604 = scalar_lea.vmem %s1, 120
  %605 = vst.msk [vmem:[%s604] sm:$0xff] %vm603, %v602
  %s606 = scalar_lea.vmem %s0, 6
  %s607 = smov 3
  %v608 = vld [vmem:[%s606] ss:$16 sm:%s607]
  %s609 = scalar_lea.vmem %s0, 6
  %s610 = smov 12
  %v611 = vld [vmem:[%s609] ss:$16 sm:%s610]
  %vm612 = vcmask 1043458
  %v613 = vsel %vm612, %v611, %v608
  %s614 = scalar_lea.vmem %s0, 6
  %s615 = smov 48
  %v616 = vld [vmem:[%s614] ss:$16 sm:%s615]
  %vm617 = vcmask 1045508
  %v618 = vsel %vm617, %v616, %v613
  %s619 = scalar_lea.vmem %s0, 6
  %s620 = smov 192
  %v621 = vld [vmem:[%s619] ss:$16 sm:%s620]
  %vm622 = vcmask 1047558
  %v623 = vsel %vm622, %v621, %v618
  %624 = vrot.lane.b32.xlu0 %v623, 96
  %v625 = vpop.permute.xlu0 %624
  %vm626 = vcmask 917248
  %627 = vst.msk [vmem:[%s1] sm:$0xff] %vm626, %v625
  %s628 = scalar_lea.vmem %s0, 262
  %s629 = smov 3
  %v630 = vld [vmem:[%s628] ss:$16 sm:%s629]
  %s631 = scalar_lea.vmem %s0, 262
  %s632 = smov 12
  %v633 = vld [vmem:[%s631] ss:$16 sm:%s632]
  %vm634 = vcmask 1043458
  %v635 = vsel %vm634, %v633, %v630
  %s636 = scalar_lea.vmem %s0, 262
  %s637 = smov 48
  %v638 = vld [vmem:[%s636] ss:$16 sm:%s637]
  %vm639 = vcmask 1045508
  %v640 = vsel %vm639, %v638, %v635
  %s641 = scalar_lea.vmem %s0, 262
  %s642 = smov 192
  %v643 = vld [vmem:[%s641] ss:$16 sm:%s642]
  %vm644 = vcmask 1047558
  %v645 = vsel %vm644, %v643, %v640
  %646 = vrot.lane.b32.xlu0 %v645, 96
  %v647 = vpop.permute.xlu0 %646
  %vm648 = vcmask 917248
  %s649 = scalar_lea.vmem %s1, 32
  %650 = vst.msk [vmem:[%s649] sm:$0xff] %vm648, %v647
  %s651 = scalar_lea.vmem %s0, 518
  %s652 = smov 3
  %v653 = vld [vmem:[%s651] ss:$16 sm:%s652]
  %s654 = scalar_lea.vmem %s0, 518
  %s655 = smov 12
  %v656 = vld [vmem:[%s654] ss:$16 sm:%s655]
  %vm657 = vcmask 1043458
  %v658 = vsel %vm657, %v656, %v653
  %s659 = scalar_lea.vmem %s0, 518
  %s660 = smov 48
  %v661 = vld [vmem:[%s659] ss:$16 sm:%s660]
  %vm662 = vcmask 1045508
  %v663 = vsel %vm662, %v661, %v658
  %s664 = scalar_lea.vmem %s0, 518
  %s665 = smov 192
  %v666 = vld [vmem:[%s664] ss:$16 sm:%s665]
  %vm667 = vcmask 1047558
  %v668 = vsel %vm667, %v666, %v663
  %669 = vrot.lane.b32.xlu0 %v668, 96
  %v670 = vpop.permute.xlu0 %669
  %vm671 = vcmask 917248
  %s672 = scalar_lea.vmem %s1, 64
  %673 = vst.msk [vmem:[%s672] sm:$0xff] %vm671, %v670
  %s674 = scalar_lea.vmem %s0, 774
  %s675 = smov 3
  %v676 = vld [vmem:[%s674] ss:$16 sm:%s675]
  %s677 = scalar_lea.vmem %s0, 774
  %s678 = smov 12
  %v679 = vld [vmem:[%s677] ss:$16 sm:%s678]
  %vm680 = vcmask 1043458
  %v681 = vsel %vm680, %v679, %v676
  %s682 = scalar_lea.vmem %s0, 774
  %s683 = smov 48
  %v684 = vld [vmem:[%s682] ss:$16 sm:%s683]
  %vm685 = vcmask 1045508
  %v686 = vsel %vm685, %v684, %v681
  %s687 = scalar_lea.vmem %s0, 774
  %s688 = smov 192
  %v689 = vld [vmem:[%s687] ss:$16 sm:%s688]
  %vm690 = vcmask 1047558
  %v691 = vsel %vm690, %v689, %v686
  %692 = vrot.lane.b32.xlu0 %v691, 96
  %v693 = vpop.permute.xlu0 %692
  %vm694 = vcmask 917248
  %s695 = scalar_lea.vmem %s1, 96
  %696 = vst.msk [vmem:[%s695] sm:$0xff] %vm694, %v693
  %s697 = scalar_lea.vmem %s0, 14
  %s698 = smov 3
  %v699 = vld [vmem:[%s697] ss:$16 sm:%s698]
  %s700 = scalar_lea.vmem %s0, 14
  %s701 = smov 12
  %v702 = vld [vmem:[%s700] ss:$16 sm:%s701]
  %vm703 = vcmask 1043458
  %v704 = vsel %vm703, %v702, %v699
  %s705 = scalar_lea.vmem %s0, 14
  %s706 = smov 48
  %v707 = vld [vmem:[%s705] ss:$16 sm:%s706]
  %vm708 = vcmask 1045508
  %v709 = vsel %vm708, %v707, %v704
  %s710 = scalar_lea.vmem %s0, 14
  %s711 = smov 192
  %v712 = vld [vmem:[%s710] ss:$16 sm:%s711]
  %vm713 = vcmask 1047558
  %v714 = vsel %vm713, %v712, %v709
  %715 = vrot.lane.b32.xlu0 %v714, 96
  %v716 = vpop.permute.xlu0 %715
  %vm717 = vcmask 917248
  %s718 = scalar_lea.vmem %s1, 8
  %719 = vst.msk [vmem:[%s718] sm:$0xff] %vm717, %v716
  %s720 = scalar_lea.vmem %s0, 270
  %s721 = smov 3
  %v722 = vld [vmem:[%s720] ss:$16 sm:%s721]
  %s723 = scalar_lea.vmem %s0, 270
  %s724 = smov 12
  %v725 = vld [vmem:[%s723] ss:$16 sm:%s724]
  %vm726 = vcmask 1043458
  %v727 = vsel %vm726, %v725, %v722
  %s728 = scalar_lea.vmem %s0, 270
  %s729 = smov 48
  %v730 = vld [vmem:[%s728] ss:$16 sm:%s729]
  %vm731 = vcmask 1045508
  %v732 = vsel %vm731, %v730, %v727
  %s733 = scalar_lea.vmem %s0, 270
  %s734 = smov 192
  %v735 = vld [vmem:[%s733] ss:$16 sm:%s734]
  %vm736 = vcmask 1047558
  %v737 = vsel %vm736, %v735, %v732
  %738 = vrot.lane.b32.xlu0 %v737, 96
  %v739 = vpop.permute.xlu0 %738
  %vm740 = vcmask 917248
  %s741 = scalar_lea.vmem %s1, 40
  %742 = vst.msk [vmem:[%s741] sm:$0xff] %vm740, %v739
  %s743 = scalar_lea.vmem %s0, 526
  %s744 = smov 3
  %v745 = vld [vmem:[%s743] ss:$16 sm:%s744]
  %s746 = scalar_lea.vmem %s0, 526
  %s747 = smov 12
  %v748 = vld [vmem:[%s746] ss:$16 sm:%s747]
  %vm749 = vcmask 1043458
  %v750 = vsel %vm749, %v748, %v745
  %s751 = scalar_lea.vmem %s0, 526
  %s752 = smov 48
  %v753 = vld [vmem:[%s751] ss:$16 sm:%s752]
  %vm754 = vcmask 1045508
  %v755 = vsel %vm754, %v753, %v750
  %s756 = scalar_lea.vmem %s0, 526
  %s757 = smov 192
  %v758 = vld [vmem:[%s756] ss:$16 sm:%s757]
  %vm759 = vcmask 1047558
  %v760 = vsel %vm759, %v758, %v755
  %761 = vrot.lane.b32.xlu0 %v760, 96
  %v762 = vpop.permute.xlu0 %761
  %vm763 = vcmask 917248
  %s764 = scalar_lea.vmem %s1, 72
  %765 = vst.msk [vmem:[%s764] sm:$0xff] %vm763, %v762
  %s766 = scalar_lea.vmem %s0, 782
  %s767 = smov 3
  %v768 = vld [vmem:[%s766] ss:$16 sm:%s767]
  %s769 = scalar_lea.vmem %s0, 782
  %s770 = smov 12
  %v771 = vld [vmem:[%s769] ss:$16 sm:%s770]
  %vm772 = vcmask 1043458
  %v773 = vsel %vm772, %v771, %v768
  %s774 = scalar_lea.vmem %s0, 782
  %s775 = smov 48
  %v776 = vld [vmem:[%s774] ss:$16 sm:%s775]
  %vm777 = vcmask 1045508
  %v778 = vsel %vm777, %v776, %v773
  %s779 = scalar_lea.vmem %s0, 782
  %s780 = smov 192
  %v781 = vld [vmem:[%s779] ss:$16 sm:%s780]
  %vm782 = vcmask 1047558
  %v783 = vsel %vm782, %v781, %v778
  %784 = vrot.lane.b32.xlu0 %v783, 96
  %v785 = vpop.permute.xlu0 %784
  %vm786 = vcmask 917248
  %s787 = scalar_lea.vmem %s1, 104
  %788 = vst.msk [vmem:[%s787] sm:$0xff] %vm786, %v785
  %s789 = scalar_lea.vmem %s0, 134
  %s790 = smov 3
  %v791 = vld [vmem:[%s789] ss:$16 sm:%s790]
  %s792 = scalar_lea.vmem %s0, 134
  %s793 = smov 12
  %v794 = vld [vmem:[%s792] ss:$16 sm:%s793]
  %vm795 = vcmask 1043458
  %v796 = vsel %vm795, %v794, %v791
  %s797 = scalar_lea.vmem %s0, 134
  %s798 = smov 48
  %v799 = vld [vmem:[%s797] ss:$16 sm:%s798]
  %vm800 = vcmask 1045508
  %v801 = vsel %vm800, %v799, %v796
  %s802 = scalar_lea.vmem %s0, 134
  %s803 = smov 192
  %v804 = vld [vmem:[%s802] ss:$16 sm:%s803]
  %vm805 = vcmask 1047558
  %v806 = vsel %vm805, %v804, %v801
  %807 = vrot.lane.b32.xlu0 %v806, 96
  %v808 = vpop.permute.xlu0 %807
  %vm809 = vcmask 917248
  %s810 = scalar_lea.vmem %s1, 16
  %811 = vst.msk [vmem:[%s810] sm:$0xff] %vm809, %v808
  %s812 = scalar_lea.vmem %s0, 390
  %s813 = smov 3
  %v814 = vld [vmem:[%s812] ss:$16 sm:%s813]
  %s815 = scalar_lea.vmem %s0, 390
  %s816 = smov 12
  %v817 = vld [vmem:[%s815] ss:$16 sm:%s816]
  %vm818 = vcmask 1043458
  %v819 = vsel %vm818, %v817, %v814
  %s820 = scalar_lea.vmem %s0, 390
  %s821 = smov 48
  %v822 = vld [vmem:[%s820] ss:$16 sm:%s821]
  %vm823 = vcmask 1045508
  %v824 = vsel %vm823, %v822, %v819
  %s825 = scalar_lea.vmem %s0, 390
  %s826 = smov 192
  %v827 = vld [vmem:[%s825] ss:$16 sm:%s826]
  %vm828 = vcmask 1047558
  %v829 = vsel %vm828, %v827, %v824
  %830 = vrot.lane.b32.xlu0 %v829, 96
  %v831 = vpop.permute.xlu0 %830
  %vm832 = vcmask 917248
  %s833 = scalar_lea.vmem %s1, 48
  %834 = vst.msk [vmem:[%s833] sm:$0xff] %vm832, %v831
  %s835 = scalar_lea.vmem %s0, 646
  %s836 = smov 3
  %v837 = vld [vmem:[%s835] ss:$16 sm:%s836]
  %s838 = scalar_lea.vmem %s0, 646
  %s839 = smov 12
  %v840 = vld [vmem:[%s838] ss:$16 sm:%s839]
  %vm841 = vcmask 1043458
  %v842 = vsel %vm841, %v840, %v837
  %s843 = scalar_lea.vmem %s0, 646
  %s844 = smov 48
  %v845 = vld [vmem:[%s843] ss:$16 sm:%s844]
  %vm846 = vcmask 1045508
  %v847 = vsel %vm846, %v845, %v842
  %s848 = scalar_lea.vmem %s0, 646
  %s849 = smov 192
  %v850 = vld [vmem:[%s848] ss:$16 sm:%s849]
  %vm851 = vcmask 1047558
  %v852 = vsel %vm851, %v850, %v847
  %853 = vrot.lane.b32.xlu0 %v852, 96
  %v854 = vpop.permute.xlu0 %853
  %vm855 = vcmask 917248
  %s856 = scalar_lea.vmem %s1, 80
  %857 = vst.msk [vmem:[%s856] sm:$0xff] %vm855, %v854
  %s858 = scalar_lea.vmem %s0, 902
  %s859 = smov 3
  %v860 = vld [vmem:[%s858] ss:$16 sm:%s859]
  %s861 = scalar_lea.vmem %s0, 902
  %s862 = smov 12
  %v863 = vld [vmem:[%s861] ss:$16 sm:%s862]
  %vm864 = vcmask 1043458
  %v865 = vsel %vm864, %v863, %v860
  %s866 = scalar_lea.vmem %s0, 902
  %s867 = smov 48
  %v868 = vld [vmem:[%s866] ss:$16 sm:%s867]
  %vm869 = vcmask 1045508
  %v870 = vsel %vm869, %v868, %v865
  %s871 = scalar_lea.vmem %s0, 902
  %s872 = smov 192
  %v873 = vld [vmem:[%s871] ss:$16 sm:%s872]
  %vm874 = vcmask 1047558
  %v875 = vsel %vm874, %v873, %v870
  %876 = vrot.lane.b32.xlu0 %v875, 96
  %v877 = vpop.permute.xlu0 %876
  %vm878 = vcmask 917248
  %s879 = scalar_lea.vmem %s1, 112
  %880 = vst.msk [vmem:[%s879] sm:$0xff] %vm878, %v877
  %s881 = scalar_lea.vmem %s0, 142
  %s882 = smov 3
  %v883 = vld [vmem:[%s881] ss:$16 sm:%s882]
  %s884 = scalar_lea.vmem %s0, 142
  %s885 = smov 12
  %v886 = vld [vmem:[%s884] ss:$16 sm:%s885]
  %vm887 = vcmask 1043458
  %v888 = vsel %vm887, %v886, %v883
  %s889 = scalar_lea.vmem %s0, 142
  %s890 = smov 48
  %v891 = vld [vmem:[%s889] ss:$16 sm:%s890]
  %vm892 = vcmask 1045508
  %v893 = vsel %vm892, %v891, %v888
  %s894 = scalar_lea.vmem %s0, 142
  %s895 = smov 192
  %v896 = vld [vmem:[%s894] ss:$16 sm:%s895]
  %vm897 = vcmask 1047558
  %v898 = vsel %vm897, %v896, %v893
  %899 = vrot.lane.b32.xlu0 %v898, 96
  %v900 = vpop.permute.xlu0 %899
  %vm901 = vcmask 917248
  %s902 = scalar_lea.vmem %s1, 24
  %903 = vst.msk [vmem:[%s902] sm:$0xff] %vm901, %v900
  %s904 = scalar_lea.vmem %s0, 398
  %s905 = smov 3
  %v906 = vld [vmem:[%s904] ss:$16 sm:%s905]
  %s907 = scalar_lea.vmem %s0, 398
  %s908 = smov 12
  %v909 = vld [vmem:[%s907] ss:$16 sm:%s908]
  %vm910 = vcmask 1043458
  %v911 = vsel %vm910, %v909, %v906
  %s912 = scalar_lea.vmem %s0, 398
  %s913 = smov 48
  %v914 = vld [vmem:[%s912] ss:$16 sm:%s913]
  %vm915 = vcmask 1045508
  %v916 = vsel %vm915, %v914, %v911
  %s917 = scalar_lea.vmem %s0, 398
  %s918 = smov 192
  %v919 = vld [vmem:[%s917] ss:$16 sm:%s918]
  %vm920 = vcmask 1047558
  %v921 = vsel %vm920, %v919, %v916
  %922 = vrot.lane.b32.xlu0 %v921, 96
  %v923 = vpop.permute.xlu0 %922
  %vm924 = vcmask 917248
  %s925 = scalar_lea.vmem %s1, 56
  %926 = vst.msk [vmem:[%s925] sm:$0xff] %vm924, %v923
  %s927 = scalar_lea.vmem %s0, 654
  %s928 = smov 3
  %v929 = vld [vmem:[%s927] ss:$16 sm:%s928]
  %s930 = scalar_lea.vmem %s0, 654
  %s931 = smov 12
  %v932 = vld [vmem:[%s930] ss:$16 sm:%s931]
  %vm933 = vcmask 1043458
  %v934 = vsel %vm933, %v932, %v929
  %s935 = scalar_lea.vmem %s0, 654
  %s936 = smov 48
  %v937 = vld [vmem:[%s935] ss:$16 sm:%s936]
  %vm938 = vcmask 1045508
  %v939 = vsel %vm938, %v937, %v934
  %s940 = scalar_lea.vmem %s0, 654
  %s941 = smov 192
  %v942 = vld [vmem:[%s940] ss:$16 sm:%s941]
  %vm943 = vcmask 1047558
  %v944 = vsel %vm943, %v942, %v939
  %945 = vrot.lane.b32.xlu0 %v944, 96
  %v946 = vpop.permute.xlu0 %945
  %vm947 = vcmask 917248
  %s948 = scalar_lea.vmem %s1, 88
  %949 = vst.msk [vmem:[%s948] sm:$0xff] %vm947, %v946
  %s950 = scalar_lea.vmem %s0, 910
  %s951 = smov 3
  %v952 = vld [vmem:[%s950] ss:$16 sm:%s951]
  %s953 = scalar_lea.vmem %s0, 910
  %s954 = smov 12
  %v955 = vld [vmem:[%s953] ss:$16 sm:%s954]
  %vm956 = vcmask 1043458
  %v957 = vsel %vm956, %v955, %v952
  %s958 = scalar_lea.vmem %s0, 910
  %s959 = smov 48
  %v960 = vld [vmem:[%s958] ss:$16 sm:%s959]
  %vm961 = vcmask 1045508
  %v962 = vsel %vm961, %v960, %v957
  %s963 = scalar_lea.vmem %s0, 910
  %s964 = smov 192
  %v965 = vld [vmem:[%s963] ss:$16 sm:%s964]
  %vm966 = vcmask 1047558
  %v967 = vsel %vm966, %v965, %v962
  %968 = vrot.lane.b32.xlu0 %v967, 96
  %v969 = vpop.permute.xlu0 %968
  %vm970 = vcmask 917248
  %s971 = scalar_lea.vmem %s1, 120
  %972 = vst.msk [vmem:[%s971] sm:$0xff] %vm970, %v969
  %s973 = scalar_lea.vmem %s0, 5
  %s974 = smov 3
  %v975 = vld [vmem:[%s973] ss:$16 sm:%s974]
  %s976 = scalar_lea.vmem %s0, 5
  %s977 = smov 12
  %v978 = vld [vmem:[%s976] ss:$16 sm:%s977]
  %vm979 = vcmask 1043458
  %v980 = vsel %vm979, %v978, %v975
  %s981 = scalar_lea.vmem %s0, 5
  %s982 = smov 48
  %v983 = vld [vmem:[%s981] ss:$16 sm:%s982]
  %vm984 = vcmask 1045508
  %v985 = vsel %vm984, %v983, %v980
  %s986 = scalar_lea.vmem %s0, 5
  %s987 = smov 192
  %v988 = vld [vmem:[%s986] ss:$16 sm:%s987]
  %vm989 = vcmask 1047558
  %v990 = vsel %vm989, %v988, %v985
  %991 = vrot.lane.b32.xlu0 %v990, 80
  %v992 = vpop.permute.xlu0 %991
  %vm993 = vcmask 786048
  %994 = vst.msk [vmem:[%s1] sm:$0xff] %vm993, %v992
  %s995 = scalar_lea.vmem %s0, 261
  %s996 = smov 3
  %v997 = vld [vmem:[%s995] ss:$16 sm:%s996]
  %s998 = scalar_lea.vmem %s0, 261
  %s999 = smov 12
  %v1000 = vld [vmem:[%s998] ss:$16 sm:%s999]
  %vm1001 = vcmask 1043458
  %v1002 = vsel %vm1001, %v1000, %v997
  %s1003 = scalar_lea.vmem %s0, 261
  %s1004 = smov 48
  %v1005 = vld [vmem:[%s1003] ss:$16 sm:%s1004]
  %vm1006 = vcmask 1045508
  %v1007 = vsel %vm1006, %v1005, %v1002
  %s1008 = scalar_lea.vmem %s0, 261
  %s1009 = smov 192
  %v1010 = vld [vmem:[%s1008] ss:$16 sm:%s1009]
  %vm1011 = vcmask 1047558
  %v1012 = vsel %vm1011, %v1010, %v1007
  %1013 = vrot.lane.b32.xlu0 %v1012, 80
  %v1014 = vpop.permute.xlu0 %1013
  %vm1015 = vcmask 786048
  %s1016 = scalar_lea.vmem %s1, 32
  %1017 = vst.msk [vmem:[%s1016] sm:$0xff] %vm1015, %v1014
  %s1018 = scalar_lea.vmem %s0, 517
  %s1019 = smov 3
  %v1020 = vld [vmem:[%s1018] ss:$16 sm:%s1019]
  %s1021 = scalar_lea.vmem %s0, 517
  %s1022 = smov 12
  %v1023 = vld [vmem:[%s1021] ss:$16 sm:%s1022]
  %vm1024 = vcmask 1043458
  %v1025 = vsel %vm1024, %v1023, %v1020
  %s1026 = scalar_lea.vmem %s0, 517
  %s1027 = smov 48
  %v1028 = vld [vmem:[%s1026] ss:$16 sm:%s1027]
  %vm1029 = vcmask 1045508
  %v1030 = vsel %vm1029, %v1028, %v1025
  %s1031 = scalar_lea.vmem %s0, 517
  %s1032 = smov 192
  %v1033 = vld [vmem:[%s1031] ss:$16 sm:%s1032]
  %vm1034 = vcmask 1047558
  %v1035 = vsel %vm1034, %v1033, %v1030
  %1036 = vrot.lane.b32.xlu0 %v1035, 80
  %v1037 = vpop.permute.xlu0 %1036
  %vm1038 = vcmask 786048
  %s1039 = scalar_lea.vmem %s1, 64
  %1040 = vst.msk [vmem:[%s1039] sm:$0xff] %vm1038, %v1037
  %s1041 = scalar_lea.vmem %s0, 773
  %s1042 = smov 3
  %v1043 = vld [vmem:[%s1041] ss:$16 sm:%s1042]
  %s1044 = scalar_lea.vmem %s0, 773
  %s1045 = smov 12
  %v1046 = vld [vmem:[%s1044] ss:$16 sm:%s1045]
  %vm1047 = vcmask 1043458
  %v1048 = vsel %vm1047, %v1046, %v1043
  %s1049 = scalar_lea.vmem %s0, 773
  %s1050 = smov 48
  %v1051 = vld [vmem:[%s1049] ss:$16 sm:%s1050]
  %vm1052 = vcmask 1045508
  %v1053 = vsel %vm1052, %v1051, %v1048
  %s1054 = scalar_lea.vmem %s0, 773
  %s1055 = smov 192
  %v1056 = vld [vmem:[%s1054] ss:$16 sm:%s1055]
  %vm1057 = vcmask 1047558
  %v1058 = vsel %vm1057, %v1056, %v1053
  %1059 = vrot.lane.b32.xlu0 %v1058, 80
  %v1060 = vpop.permute.xlu0 %1059
  %vm1061 = vcmask 786048
  %s1062 = scalar_lea.vmem %s1, 96
  %1063 = vst.msk [vmem:[%s1062] sm:$0xff] %vm1061, %v1060
  %s1064 = scalar_lea.vmem %s0, 13
  %s1065 = smov 3
  %v1066 = vld [vmem:[%s1064] ss:$16 sm:%s1065]
  %s1067 = scalar_lea.vmem %s0, 13
  %s1068 = smov 12
  %v1069 = vld [vmem:[%s1067] ss:$16 sm:%s1068]
  %vm1070 = vcmask 1043458
  %v1071 = vsel %vm1070, %v1069, %v1066
  %s1072 = scalar_lea.vmem %s0, 13
  %s1073 = smov 48
  %v1074 = vld [vmem:[%s1072] ss:$16 sm:%s1073]
  %vm1075 = vcmask 1045508
  %v1076 = vsel %vm1075, %v1074, %v1071
  %s1077 = scalar_lea.vmem %s0, 13
  %s1078 = smov 192
  %v1079 = vld [vmem:[%s1077] ss:$16 sm:%s1078]
  %vm1080 = vcmask 1047558
  %v1081 = vsel %vm1080, %v1079, %v1076
  %1082 = vrot.lane.b32.xlu0 %v1081, 80
  %v1083 = vpop.permute.xlu0 %1082
  %vm1084 = vcmask 786048
  %s1085 = scalar_lea.vmem %s1, 8
  %1086 = vst.msk [vmem:[%s1085] sm:$0xff] %vm1084, %v1083
  %s1087 = scalar_lea.vmem %s0, 269
  %s1088 = smov 3
  %v1089 = vld [vmem:[%s1087] ss:$16 sm:%s1088]
  %s1090 = scalar_lea.vmem %s0, 269
  %s1091 = smov 12
  %v1092 = vld [vmem:[%s1090] ss:$16 sm:%s1091]
  %vm1093 = vcmask 1043458
  %v1094 = vsel %vm1093, %v1092, %v1089
  %s1095 = scalar_lea.vmem %s0, 269
  %s1096 = smov 48
  %v1097 = vld [vmem:[%s1095] ss:$16 sm:%s1096]
  %vm1098 = vcmask 1045508
  %v1099 = vsel %vm1098, %v1097, %v1094
  %s1100 = scalar_lea.vmem %s0, 269
  %s1101 = smov 192
  %v1102 = vld [vmem:[%s1100] ss:$16 sm:%s1101]
  %vm1103 = vcmask 1047558
  %v1104 = vsel %vm1103, %v1102, %v1099
  %1105 = vrot.lane.b32.xlu0 %v1104, 80
  %v1106 = vpop.permute.xlu0 %1105
  %vm1107 = vcmask 786048
  %s1108 = scalar_lea.vmem %s1, 40
  %1109 = vst.msk [vmem:[%s1108] sm:$0xff] %vm1107, %v1106
  %s1110 = scalar_lea.vmem %s0, 525
  %s1111 = smov 3
  %v1112 = vld [vmem:[%s1110] ss:$16 sm:%s1111]
  %s1113 = scalar_lea.vmem %s0, 525
  %s1114 = smov 12
  %v1115 = vld [vmem:[%s1113] ss:$16 sm:%s1114]
  %vm1116 = vcmask 1043458
  %v1117 = vsel %vm1116, %v1115, %v1112
  %s1118 = scalar_lea.vmem %s0, 525
  %s1119 = smov 48
  %v1120 = vld [vmem:[%s1118] ss:$16 sm:%s1119]
  %vm1121 = vcmask 1045508
  %v1122 = vsel %vm1121, %v1120, %v1117
  %s1123 = scalar_lea.vmem %s0, 525
  %s1124 = smov 192
  %v1125 = vld [vmem:[%s1123] ss:$16 sm:%s1124]
  %vm1126 = vcmask 1047558
  %v1127 = vsel %vm1126, %v1125, %v1122
  %1128 = vrot.lane.b32.xlu0 %v1127, 80
  %v1129 = vpop.permute.xlu0 %1128
  %vm1130 = vcmask 786048
  %s1131 = scalar_lea.vmem %s1, 72
  %1132 = vst.msk [vmem:[%s1131] sm:$0xff] %vm1130, %v1129
  %s1133 = scalar_lea.vmem %s0, 781
  %s1134 = smov 3
  %v1135 = vld [vmem:[%s1133] ss:$16 sm:%s1134]
  %s1136 = scalar_lea.vmem %s0, 781
  %s1137 = smov 12
  %v1138 = vld [vmem:[%s1136] ss:$16 sm:%s1137]
  %vm1139 = vcmask 1043458
  %v1140 = vsel %vm1139, %v1138, %v1135
  %s1141 = scalar_lea.vmem %s0, 781
  %s1142 = smov 48
  %v1143 = vld [vmem:[%s1141] ss:$16 sm:%s1142]
  %vm1144 = vcmask 1045508
  %v1145 = vsel %vm1144, %v1143, %v1140
  %s1146 = scalar_lea.vmem %s0, 781
  %s1147 = smov 192
  %v1148 = vld [vmem:[%s1146] ss:$16 sm:%s1147]
  %vm1149 = vcmask 1047558
  %v1150 = vsel %vm1149, %v1148, %v1145
  %1151 = vrot.lane.b32.xlu0 %v1150, 80
  %v1152 = vpop.permute.xlu0 %1151
  %vm1153 = vcmask 786048
  %s1154 = scalar_lea.vmem %s1, 104
  %1155 = vst.msk [vmem:[%s1154] sm:$0xff] %vm1153, %v1152
  %s1156 = scalar_lea.vmem %s0, 133
  %s1157 = smov 3
  %v1158 = vld [vmem:[%s1156] ss:$16 sm:%s1157]
  %s1159 = scalar_lea.vmem %s0, 133
  %s1160 = smov 12
  %v1161 = vld [vmem:[%s1159] ss:$16 sm:%s1160]
  %vm1162 = vcmask 1043458
  %v1163 = vsel %vm1162, %v1161, %v1158
  %s1164 = scalar_lea.vmem %s0, 133
  %s1165 = smov 48
  %v1166 = vld [vmem:[%s1164] ss:$16 sm:%s1165]
  %vm1167 = vcmask 1045508
  %v1168 = vsel %vm1167, %v1166, %v1163
  %s1169 = scalar_lea.vmem %s0, 133
  %s1170 = smov 192
  %v1171 = vld [vmem:[%s1169] ss:$16 sm:%s1170]
  %vm1172 = vcmask 1047558
  %v1173 = vsel %vm1172, %v1171, %v1168
  %1174 = vrot.lane.b32.xlu0 %v1173, 80
  %v1175 = vpop.permute.xlu0 %1174
  %vm1176 = vcmask 786048
  %s1177 = scalar_lea.vmem %s1, 16
  %1178 = vst.msk [vmem:[%s1177] sm:$0xff] %vm1176, %v1175
  %s1179 = scalar_lea.vmem %s0, 389
  %s1180 = smov 3
  %v1181 = vld [vmem:[%s1179] ss:$16 sm:%s1180]
  %s1182 = scalar_lea.vmem %s0, 389
  %s1183 = smov 12
  %v1184 = vld [vmem:[%s1182] ss:$16 sm:%s1183]
  %vm1185 = vcmask 1043458
  %v1186 = vsel %vm1185, %v1184, %v1181
  %s1187 = scalar_lea.vmem %s0, 389
  %s1188 = smov 48
  %v1189 = vld [vmem:[%s1187] ss:$16 sm:%s1188]
  %vm1190 = vcmask 1045508
  %v1191 = vsel %vm1190, %v1189, %v1186
  %s1192 = scalar_lea.vmem %s0, 389
  %s1193 = smov 192
  %v1194 = vld [vmem:[%s1192] ss:$16 sm:%s1193]
  %vm1195 = vcmask 1047558
  %v1196 = vsel %vm1195, %v1194, %v1191
  %1197 = vrot.lane.b32.xlu0 %v1196, 80
  %v1198 = vpop.permute.xlu0 %1197
  %vm1199 = vcmask 786048
  %s1200 = scalar_lea.vmem %s1, 48
  %1201 = vst.msk [vmem:[%s1200] sm:$0xff] %vm1199, %v1198
  %s1202 = scalar_lea.vmem %s0, 645
  %s1203 = smov 3
  %v1204 = vld [vmem:[%s1202] ss:$16 sm:%s1203]
  %s1205 = scalar_lea.vmem %s0, 645
  %s1206 = smov 12
  %v1207 = vld [vmem:[%s1205] ss:$16 sm:%s1206]
  %vm1208 = vcmask 1043458
  %v1209 = vsel %vm1208, %v1207, %v1204
  %s1210 = scalar_lea.vmem %s0, 645
  %s1211 = smov 48
  %v1212 = vld [vmem:[%s1210] ss:$16 sm:%s1211]
  %vm1213 = vcmask 1045508
  %v1214 = vsel %vm1213, %v1212, %v1209
  %s1215 = scalar_lea.vmem %s0, 645
  %s1216 = smov 192
  %v1217 = vld [vmem:[%s1215] ss:$16 sm:%s1216]
  %vm1218 = vcmask 1047558
  %v1219 = vsel %vm1218, %v1217, %v1214
  %1220 = vrot.lane.b32.xlu0 %v1219, 80
  %v1221 = vpop.permute.xlu0 %1220
  %vm1222 = vcmask 786048
  %s1223 = scalar_lea.vmem %s1, 80
  %1224 = vst.msk [vmem:[%s1223] sm:$0xff] %vm1222, %v1221
  %s1225 = scalar_lea.vmem %s0, 901
  %s1226 = smov 3
  %v1227 = vld [vmem:[%s1225] ss:$16 sm:%s1226]
  %s1228 = scalar_lea.vmem %s0, 901
  %s1229 = smov 12
  %v1230 = vld [vmem:[%s1228] ss:$16 sm:%s1229]
  %vm1231 = vcmask 1043458
  %v1232 = vsel %vm1231, %v1230, %v1227
  %s1233 = scalar_lea.vmem %s0, 901
  %s1234 = smov 48
  %v1235 = vld [vmem:[%s1233] ss:$16 sm:%s1234]
  %vm1236 = vcmask 1045508
  %v1237 = vsel %vm1236, %v1235, %v1232
  %s1238 = scalar_lea.vmem %s0, 901
  %s1239 = smov 192
  %v1240 = vld [vmem:[%s1238] ss:$16 sm:%s1239]
  %vm1241 = vcmask 1047558
  %v1242 = vsel %vm1241, %v1240, %v1237
  %1243 = vrot.lane.b32.xlu0 %v1242, 80
  %v1244 = vpop.permute.xlu0 %1243
  %vm1245 = vcmask 786048
  %s1246 = scalar_lea.vmem %s1, 112
  %1247 = vst.msk [vmem:[%s1246] sm:$0xff] %vm1245, %v1244
  %s1248 = scalar_lea.vmem %s0, 141
  %s1249 = smov 3
  %v1250 = vld [vmem:[%s1248] ss:$16 sm:%s1249]
  %s1251 = scalar_lea.vmem %s0, 141
  %s1252 = smov 12
  %v1253 = vld [vmem:[%s1251] ss:$16 sm:%s1252]
  %vm1254 = vcmask 1043458
  %v1255 = vsel %vm1254, %v1253, %v1250
  %s1256 = scalar_lea.vmem %s0, 141
  %s1257 = smov 48
  %v1258 = vld [vmem:[%s1256] ss:$16 sm:%s1257]
  %vm1259 = vcmask 1045508
  %v1260 = vsel %vm1259, %v1258, %v1255
  %s1261 = scalar_lea.vmem %s0, 141
  %s1262 = smov 192
  %v1263 = vld [vmem:[%s1261] ss:$16 sm:%s1262]
  %vm1264 = vcmask 1047558
  %v1265 = vsel %vm1264, %v1263, %v1260
  %1266 = vrot.lane.b32.xlu0 %v1265, 80
  %v1267 = vpop.permute.xlu0 %1266
  %vm1268 = vcmask 786048
  %s1269 = scalar_lea.vmem %s1, 24
  %1270 = vst.msk [vmem:[%s1269] sm:$0xff] %vm1268, %v1267
  %s1271 = scalar_lea.vmem %s0, 397
  %s1272 = smov 3
  %v1273 = vld [vmem:[%s1271] ss:$16 sm:%s1272]
  %s1274 = scalar_lea.vmem %s0, 397
  %s1275 = smov 12
  %v1276 = vld [vmem:[%s1274] ss:$16 sm:%s1275]
  %vm1277 = vcmask 1043458
  %v1278 = vsel %vm1277, %v1276, %v1273
  %s1279 = scalar_lea.vmem %s0, 397
  %s1280 = smov 48
  %v1281 = vld [vmem:[%s1279] ss:$16 sm:%s1280]
  %vm1282 = vcmask 1045508
  %v1283 = vsel %vm1282, %v1281, %v1278
  %s1284 = scalar_lea.vmem %s0, 397
  %s1285 = smov 192
  %v1286 = vld [vmem:[%s1284] ss:$16 sm:%s1285]
  %vm1287 = vcmask 1047558
  %v1288 = vsel %vm1287, %v1286, %v1283
  %1289 = vrot.lane.b32.xlu0 %v1288, 80
  %v1290 = vpop.permute.xlu0 %1289
  %vm1291 = vcmask 786048
  %s1292 = scalar_lea.vmem %s1, 56
  %1293 = vst.msk [vmem:[%s1292] sm:$0xff] %vm1291, %v1290
  %s1294 = scalar_lea.vmem %s0, 653
  %s1295 = smov 3
  %v1296 = vld [vmem:[%s1294] ss:$16 sm:%s1295]
  %s1297 = scalar_lea.vmem %s0, 653
  %s1298 = smov 12
  %v1299 = vld [vmem:[%s1297] ss:$16 sm:%s1298]
  %vm1300 = vcmask 1043458
  %v1301 = vsel %vm1300, %v1299, %v1296
  %s1302 = scalar_lea.vmem %s0, 653
  %s1303 = smov 48
  %v1304 = vld [vmem:[%s1302] ss:$16 sm:%s1303]
  %vm1305 = vcmask 1045508
  %v1306 = vsel %vm1305, %v1304, %v1301
  %s1307 = scalar_lea.vmem %s0, 653
  %s1308 = smov 192
  %v1309 = vld [vmem:[%s1307] ss:$16 sm:%s1308]
  %vm1310 = vcmask 1047558
  %v1311 = vsel %vm1310, %v1309, %v1306
  %1312 = vrot.lane.b32.xlu0 %v1311, 80
  %v1313 = vpop.permute.xlu0 %1312
  %vm1314 = vcmask 786048
  %s1315 = scalar_lea.vmem %s1, 88
  %1316 = vst.msk [vmem:[%s1315] sm:$0xff] %vm1314, %v1313
  %s1317 = scalar_lea.vmem %s0, 909
  %s1318 = smov 3
  %v1319 = vld [vmem:[%s1317] ss:$16 sm:%s1318]
  %s1320 = scalar_lea.vmem %s0, 909
  %s1321 = smov 12
  %v1322 = vld [vmem:[%s1320] ss:$16 sm:%s1321]
  %vm1323 = vcmask 1043458
  %v1324 = vsel %vm1323, %v1322, %v1319
  %s1325 = scalar_lea.vmem %s0, 909
  %s1326 = smov 48
  %v1327 = vld [vmem:[%s1325] ss:$16 sm:%s1326]
  %vm1328 = vcmask 1045508
  %v1329 = vsel %vm1328, %v1327, %v1324
  %s1330 = scalar_lea.vmem %s0, 909
  %s1331 = smov 192
  %v1332 = vld [vmem:[%s1330] ss:$16 sm:%s1331]
  %vm1333 = vcmask 1047558
  %v1334 = vsel %vm1333, %v1332, %v1329
  %1335 = vrot.lane.b32.xlu0 %v1334, 80
  %v1336 = vpop.permute.xlu0 %1335
  %vm1337 = vcmask 786048
  %s1338 = scalar_lea.vmem %s1, 120
  %1339 = vst.msk [vmem:[%s1338] sm:$0xff] %vm1337, %v1336
  %s1340 = scalar_lea.vmem %s0, 4
  %s1341 = smov 3
  %v1342 = vld [vmem:[%s1340] ss:$16 sm:%s1341]
  %s1343 = scalar_lea.vmem %s0, 4
  %s1344 = smov 12
  %v1345 = vld [vmem:[%s1343] ss:$16 sm:%s1344]
  %vm1346 = vcmask 1043458
  %v1347 = vsel %vm1346, %v1345, %v1342
  %s1348 = scalar_lea.vmem %s0, 4
  %s1349 = smov 48
  %v1350 = vld [vmem:[%s1348] ss:$16 sm:%s1349]
  %vm1351 = vcmask 1045508
  %v1352 = vsel %vm1351, %v1350, %v1347
  %s1353 = scalar_lea.vmem %s0, 4
  %s1354 = smov 192
  %v1355 = vld [vmem:[%s1353] ss:$16 sm:%s1354]
  %vm1356 = vcmask 1047558
  %v1357 = vsel %vm1356, %v1355, %v1352
  %1358 = vrot.lane.b32.xlu0 %v1357, 64
  %v1359 = vpop.permute.xlu0 %1358
  %vm1360 = vcmask 654848
  %1361 = vst.msk [vmem:[%s1] sm:$0xff] %vm1360, %v1359
  %s1362 = scalar_lea.vmem %s0, 260
  %s1363 = smov 3
  %v1364 = vld [vmem:[%s1362] ss:$16 sm:%s1363]
  %s1365 = scalar_lea.vmem %s0, 260
  %s1366 = smov 12
  %v1367 = vld [vmem:[%s1365] ss:$16 sm:%s1366]
  %vm1368 = vcmask 1043458
  %v1369 = vsel %vm1368, %v1367, %v1364
  %s1370 = scalar_lea.vmem %s0, 260
  %s1371 = smov 48
  %v1372 = vld [vmem:[%s1370] ss:$16 sm:%s1371]
  %vm1373 = vcmask 1045508
  %v1374 = vsel %vm1373, %v1372, %v1369
  %s1375 = scalar_lea.vmem %s0, 260
  %s1376 = smov 192
  %v1377 = vld [vmem:[%s1375] ss:$16 sm:%s1376]
  %vm1378 = vcmask 1047558
  %v1379 = vsel %vm1378, %v1377, %v1374
  %1380 = vrot.lane.b32.xlu0 %v1379, 64
  %v1381 = vpop.permute.xlu0 %1380
  %vm1382 = vcmask 654848
  %s1383 = scalar_lea.vmem %s1, 32
  %1384 = vst.msk [vmem:[%s1383] sm:$0xff] %vm1382, %v1381
  %s1385 = scalar_lea.vmem %s0, 516
  %s1386 = smov 3
  %v1387 = vld [vmem:[%s1385] ss:$16 sm:%s1386]
  %s1388 = scalar_lea.vmem %s0, 516
  %s1389 = smov 12
  %v1390 = vld [vmem:[%s1388] ss:$16 sm:%s1389]
  %vm1391 = vcmask 1043458
  %v1392 = vsel %vm1391, %v1390, %v1387
  %s1393 = scalar_lea.vmem %s0, 516
  %s1394 = smov 48
  %v1395 = vld [vmem:[%s1393] ss:$16 sm:%s1394]
  %vm1396 = vcmask 1045508
  %v1397 = vsel %vm1396, %v1395, %v1392
  %s1398 = scalar_lea.vmem %s0, 516
  %s1399 = smov 192
  %v1400 = vld [vmem:[%s1398] ss:$16 sm:%s1399]
  %vm1401 = vcmask 1047558
  %v1402 = vsel %vm1401, %v1400, %v1397
  %1403 = vrot.lane.b32.xlu0 %v1402, 64
  %v1404 = vpop.permute.xlu0 %1403
  %vm1405 = vcmask 654848
  %s1406 = scalar_lea.vmem %s1, 64
  %1407 = vst.msk [vmem:[%s1406] sm:$0xff] %vm1405, %v1404
  %s1408 = scalar_lea.vmem %s0, 772
  %s1409 = smov 3
  %v1410 = vld [vmem:[%s1408] ss:$16 sm:%s1409]
  %s1411 = scalar_lea.vmem %s0, 772
  %s1412 = smov 12
  %v1413 = vld [vmem:[%s1411] ss:$16 sm:%s1412]
  %vm1414 = vcmask 1043458
  %v1415 = vsel %vm1414, %v1413, %v1410
  %s1416 = scalar_lea.vmem %s0, 772
  %s1417 = smov 48
  %v1418 = vld [vmem:[%s1416] ss:$16 sm:%s1417]
  %vm1419 = vcmask 1045508
  %v1420 = vsel %vm1419, %v1418, %v1415
  %s1421 = scalar_lea.vmem %s0, 772
  %s1422 = smov 192
  %v1423 = vld [vmem:[%s1421] ss:$16 sm:%s1422]
  %vm1424 = vcmask 1047558
  %v1425 = vsel %vm1424, %v1423, %v1420
  %1426 = vrot.lane.b32.xlu0 %v1425, 64
  %v1427 = vpop.permute.xlu0 %1426
  %vm1428 = vcmask 654848
  %s1429 = scalar_lea.vmem %s1, 96
  %1430 = vst.msk [vmem:[%s1429] sm:$0xff] %vm1428, %v1427
  %s1431 = scalar_lea.vmem %s0, 12
  %s1432 = smov 3
  %v1433 = vld [vmem:[%s1431] ss:$16 sm:%s1432]
  %s1434 = scalar_lea.vmem %s0, 12
  %s1435 = smov 12
  %v1436 = vld [vmem:[%s1434] ss:$16 sm:%s1435]
  %vm1437 = vcmask 1043458
  %v1438 = vsel %vm1437, %v1436, %v1433
  %s1439 = scalar_lea.vmem %s0, 12
  %s1440 = smov 48
  %v1441 = vld [vmem:[%s1439] ss:$16 sm:%s1440]
  %vm1442 = vcmask 1045508
  %v1443 = vsel %vm1442, %v1441, %v1438
  %s1444 = scalar_lea.vmem %s0, 12
  %s1445 = smov 192
  %v1446 = vld [vmem:[%s1444] ss:$16 sm:%s1445]
  %vm1447 = vcmask 1047558
  %v1448 = vsel %vm1447, %v1446, %v1443
  %1449 = vrot.lane.b32.xlu0 %v1448, 64
  %v1450 = vpop.permute.xlu0 %1449
  %vm1451 = vcmask 654848
  %s1452 = scalar_lea.vmem %s1, 8
  %1453 = vst.msk [vmem:[%s1452] sm:$0xff] %vm1451, %v1450
  %s1454 = scalar_lea.vmem %s0, 268
  %s1455 = smov 3
  %v1456 = vld [vmem:[%s1454] ss:$16 sm:%s1455]
  %s1457 = scalar_lea.vmem %s0, 268
  %s1458 = smov 12
  %v1459 = vld [vmem:[%s1457] ss:$16 sm:%s1458]
  %vm1460 = vcmask 1043458
  %v1461 = vsel %vm1460, %v1459, %v1456
  %s1462 = scalar_lea.vmem %s0, 268
  %s1463 = smov 48
  %v1464 = vld [vmem:[%s1462] ss:$16 sm:%s1463]
  %vm1465 = vcmask 1045508
  %v1466 = vsel %vm1465, %v1464, %v1461
  %s1467 = scalar_lea.vmem %s0, 268
  %s1468 = smov 192
  %v1469 = vld [vmem:[%s1467] ss:$16 sm:%s1468]
  %vm1470 = vcmask 1047558
  %v1471 = vsel %vm1470, %v1469, %v1466
  %1472 = vrot.lane.b32.xlu0 %v1471, 64
  %v1473 = vpop.permute.xlu0 %1472
  %vm1474 = vcmask 654848
  %s1475 = scalar_lea.vmem %s1, 40
  %1476 = vst.msk [vmem:[%s1475] sm:$0xff] %vm1474, %v1473
  %s1477 = scalar_lea.vmem %s0, 524
  %s1478 = smov 3
  %v1479 = vld [vmem:[%s1477] ss:$16 sm:%s1478]
  %s1480 = scalar_lea.vmem %s0, 524
  %s1481 = smov 12
  %v1482 = vld [vmem:[%s1480] ss:$16 sm:%s1481]
  %vm1483 = vcmask 1043458
  %v1484 = vsel %vm1483, %v1482, %v1479
  %s1485 = scalar_lea.vmem %s0, 524
  %s1486 = smov 48
  %v1487 = vld [vmem:[%s1485] ss:$16 sm:%s1486]
  %vm1488 = vcmask 1045508
  %v1489 = vsel %vm1488, %v1487, %v1484
  %s1490 = scalar_lea.vmem %s0, 524
  %s1491 = smov 192
  %v1492 = vld [vmem:[%s1490] ss:$16 sm:%s1491]
  %vm1493 = vcmask 1047558
  %v1494 = vsel %vm1493, %v1492, %v1489
  %1495 = vrot.lane.b32.xlu0 %v1494, 64
  %v1496 = vpop.permute.xlu0 %1495
  %vm1497 = vcmask 654848
  %s1498 = scalar_lea.vmem %s1, 72
  %1499 = vst.msk [vmem:[%s1498] sm:$0xff] %vm1497, %v1496
  %s1500 = scalar_lea.vmem %s0, 780
  %s1501 = smov 3
  %v1502 = vld [vmem:[%s1500] ss:$16 sm:%s1501]
  %s1503 = scalar_lea.vmem %s0, 780
  %s1504 = smov 12
  %v1505 = vld [vmem:[%s1503] ss:$16 sm:%s1504]
  %vm1506 = vcmask 1043458
  %v1507 = vsel %vm1506, %v1505, %v1502
  %s1508 = scalar_lea.vmem %s0, 780
  %s1509 = smov 48
  %v1510 = vld [vmem:[%s1508] ss:$16 sm:%s1509]
  %vm1511 = vcmask 1045508
  %v1512 = vsel %vm1511, %v1510, %v1507
  %s1513 = scalar_lea.vmem %s0, 780
  %s1514 = smov 192
  %v1515 = vld [vmem:[%s1513] ss:$16 sm:%s1514]
  %vm1516 = vcmask 1047558
  %v1517 = vsel %vm1516, %v1515, %v1512
  %1518 = vrot.lane.b32.xlu0 %v1517, 64
  %v1519 = vpop.permute.xlu0 %1518
  %vm1520 = vcmask 654848
  %s1521 = scalar_lea.vmem %s1, 104
  %1522 = vst.msk [vmem:[%s1521] sm:$0xff] %vm1520, %v1519
  %s1523 = scalar_lea.vmem %s0, 132
  %s1524 = smov 3
  %v1525 = vld [vmem:[%s1523] ss:$16 sm:%s1524]
  %s1526 = scalar_lea.vmem %s0, 132
  %s1527 = smov 12
  %v1528 = vld [vmem:[%s1526] ss:$16 sm:%s1527]
  %vm1529 = vcmask 1043458
  %v1530 = vsel %vm1529, %v1528, %v1525
  %s1531 = scalar_lea.vmem %s0, 132
  %s1532 = smov 48
  %v1533 = vld [vmem:[%s1531] ss:$16 sm:%s1532]
  %vm1534 = vcmask 1045508
  %v1535 = vsel %vm1534, %v1533, %v1530
  %s1536 = scalar_lea.vmem %s0, 132
  %s1537 = smov 192
  %v1538 = vld [vmem:[%s1536] ss:$16 sm:%s1537]
  %vm1539 = vcmask 1047558
  %v1540 = vsel %vm1539, %v1538, %v1535
  %1541 = vrot.lane.b32.xlu0 %v1540, 64
  %v1542 = vpop.permute.xlu0 %1541
  %vm1543 = vcmask 654848
  %s1544 = scalar_lea.vmem %s1, 16
  %1545 = vst.msk [vmem:[%s1544] sm:$0xff] %vm1543, %v1542
  %s1546 = scalar_lea.vmem %s0, 388
  %s1547 = smov 3
  %v1548 = vld [vmem:[%s1546] ss:$16 sm:%s1547]
  %s1549 = scalar_lea.vmem %s0, 388
  %s1550 = smov 12
  %v1551 = vld [vmem:[%s1549] ss:$16 sm:%s1550]
  %vm1552 = vcmask 1043458
  %v1553 = vsel %vm1552, %v1551, %v1548
  %s1554 = scalar_lea.vmem %s0, 388
  %s1555 = smov 48
  %v1556 = vld [vmem:[%s1554] ss:$16 sm:%s1555]
  %vm1557 = vcmask 1045508
  %v1558 = vsel %vm1557, %v1556, %v1553
  %s1559 = scalar_lea.vmem %s0, 388
  %s1560 = smov 192
  %v1561 = vld [vmem:[%s1559] ss:$16 sm:%s1560]
  %vm1562 = vcmask 1047558
  %v1563 = vsel %vm1562, %v1561, %v1558
  %1564 = vrot.lane.b32.xlu0 %v1563, 64
  %v1565 = vpop.permute.xlu0 %1564
  %vm1566 = vcmask 654848
  %s1567 = scalar_lea.vmem %s1, 48
  %1568 = vst.msk [vmem:[%s1567] sm:$0xff] %vm1566, %v1565
  %s1569 = scalar_lea.vmem %s0, 644
  %s1570 = smov 3
  %v1571 = vld [vmem:[%s1569] ss:$16 sm:%s1570]
  %s1572 = scalar_lea.vmem %s0, 644
  %s1573 = smov 12
  %v1574 = vld [vmem:[%s1572] ss:$16 sm:%s1573]
  %vm1575 = vcmask 1043458
  %v1576 = vsel %vm1575, %v1574, %v1571
  %s1577 = scalar_lea.vmem %s0, 644
  %s1578 = smov 48
  %v1579 = vld [vmem:[%s1577] ss:$16 sm:%s1578]
  %vm1580 = vcmask 1045508
  %v1581 = vsel %vm1580, %v1579, %v1576
  %s1582 = scalar_lea.vmem %s0, 644
  %s1583 = smov 192
  %v1584 = vld [vmem:[%s1582] ss:$16 sm:%s1583]
  %vm1585 = vcmask 1047558
  %v1586 = vsel %vm1585, %v1584, %v1581
  %1587 = vrot.lane.b32.xlu0 %v1586, 64
  %v1588 = vpop.permute.xlu0 %1587
  %vm1589 = vcmask 654848
  %s1590 = scalar_lea.vmem %s1, 80
  %1591 = vst.msk [vmem:[%s1590] sm:$0xff] %vm1589, %v1588
  %s1592 = scalar_lea.vmem %s0, 900
  %s1593 = smov 3
  %v1594 = vld [vmem:[%s1592] ss:$16 sm:%s1593]
  %s1595 = scalar_lea.vmem %s0, 900
  %s1596 = smov 12
  %v1597 = vld [vmem:[%s1595] ss:$16 sm:%s1596]
  %vm1598 = vcmask 1043458
  %v1599 = vsel %vm1598, %v1597, %v1594
  %s1600 = scalar_lea.vmem %s0, 900
  %s1601 = smov 48
  %v1602 = vld [vmem:[%s1600] ss:$16 sm:%s1601]
  %vm1603 = vcmask 1045508
  %v1604 = vsel %vm1603, %v1602, %v1599
  %s1605 = scalar_lea.vmem %s0, 900
  %s1606 = smov 192
  %v1607 = vld [vmem:[%s1605] ss:$16 sm:%s1606]
  %vm1608 = vcmask 1047558
  %v1609 = vsel %vm1608, %v1607, %v1604
  %1610 = vrot.lane.b32.xlu0 %v1609, 64
  %v1611 = vpop.permute.xlu0 %1610
  %vm1612 = vcmask 654848
  %s1613 = scalar_lea.vmem %s1, 112
  %1614 = vst.msk [vmem:[%s1613] sm:$0xff] %vm1612, %v1611
  %s1615 = scalar_lea.vmem %s0, 140
  %s1616 = smov 3
  %v1617 = vld [vmem:[%s1615] ss:$16 sm:%s1616]
  %s1618 = scalar_lea.vmem %s0, 140
  %s1619 = smov 12
  %v1620 = vld [vmem:[%s1618] ss:$16 sm:%s1619]
  %vm1621 = vcmask 1043458
  %v1622 = vsel %vm1621, %v1620, %v1617
  %s1623 = scalar_lea.vmem %s0, 140
  %s1624 = smov 48
  %v1625 = vld [vmem:[%s1623] ss:$16 sm:%s1624]
  %vm1626 = vcmask 1045508
  %v1627 = vsel %vm1626, %v1625, %v1622
  %s1628 = scalar_lea.vmem %s0, 140
  %s1629 = smov 192
  %v1630 = vld [vmem:[%s1628] ss:$16 sm:%s1629]
  %vm1631 = vcmask 1047558
  %v1632 = vsel %vm1631, %v1630, %v1627
  %1633 = vrot.lane.b32.xlu0 %v1632, 64
  %v1634 = vpop.permute.xlu0 %1633
  %vm1635 = vcmask 654848
  %s1636 = scalar_lea.vmem %s1, 24
  %1637 = vst.msk [vmem:[%s1636] sm:$0xff] %vm1635, %v1634
  %s1638 = scalar_lea.vmem %s0, 396
  %s1639 = smov 3
  %v1640 = vld [vmem:[%s1638] ss:$16 sm:%s1639]
  %s1641 = scalar_lea.vmem %s0, 396
  %s1642 = smov 12
  %v1643 = vld [vmem:[%s1641] ss:$16 sm:%s1642]
  %vm1644 = vcmask 1043458
  %v1645 = vsel %vm1644, %v1643, %v1640
  %s1646 = scalar_lea.vmem %s0, 396
  %s1647 = smov 48
  %v1648 = vld [vmem:[%s1646] ss:$16 sm:%s1647]
  %vm1649 = vcmask 1045508
  %v1650 = vsel %vm1649, %v1648, %v1645
  %s1651 = scalar_lea.vmem %s0, 396
  %s1652 = smov 192
  %v1653 = vld [vmem:[%s1651] ss:$16 sm:%s1652]
  %vm1654 = vcmask 1047558
  %v1655 = vsel %vm1654, %v1653, %v1650
  %1656 = vrot.lane.b32.xlu0 %v1655, 64
  %v1657 = vpop.permute.xlu0 %1656
  %vm1658 = vcmask 654848
  %s1659 = scalar_lea.vmem %s1, 56
  %1660 = vst.msk [vmem:[%s1659] sm:$0xff] %vm1658, %v1657
  %s1661 = scalar_lea.vmem %s0, 652
  %s1662 = smov 3
  %v1663 = vld [vmem:[%s1661] ss:$16 sm:%s1662]
  %s1664 = scalar_lea.vmem %s0, 652
  %s1665 = smov 12
  %v1666 = vld [vmem:[%s1664] ss:$16 sm:%s1665]
  %vm1667 = vcmask 1043458
  %v1668 = vsel %vm1667, %v1666, %v1663
  %s1669 = scalar_lea.vmem %s0, 652
  %s1670 = smov 48
  %v1671 = vld [vmem:[%s1669] ss:$16 sm:%s1670]
  %vm1672 = vcmask 1045508
  %v1673 = vsel %vm1672, %v1671, %v1668
  %s1674 = scalar_lea.vmem %s0, 652
  %s1675 = smov 192
  %v1676 = vld [vmem:[%s1674] ss:$16 sm:%s1675]
  %vm1677 = vcmask 1047558
  %v1678 = vsel %vm1677, %v1676, %v1673
  %1679 = vrot.lane.b32.xlu0 %v1678, 64
  %v1680 = vpop.permute.xlu0 %1679
  %vm1681 = vcmask 654848
  %s1682 = scalar_lea.vmem %s1, 88
  %1683 = vst.msk [vmem:[%s1682] sm:$0xff] %vm1681, %v1680
  %s1684 = scalar_lea.vmem %s0, 908
  %s1685 = smov 3
  %v1686 = vld [vmem:[%s1684] ss:$16 sm:%s1685]
  %s1687 = scalar_lea.vmem %s0, 908
  %s1688 = smov 12
  %v1689 = vld [vmem:[%s1687] ss:$16 sm:%s1688]
  %vm1690 = vcmask 1043458
  %v1691 = vsel %vm1690, %v1689, %v1686
  %s1692 = scalar_lea.vmem %s0, 908
  %s1693 = smov 48
  %v1694 = vld [vmem:[%s1692] ss:$16 sm:%s1693]
  %vm1695 = vcmask 1045508
  %v1696 = vsel %vm1695, %v1694, %v1691
  %s1697 = scalar_lea.vmem %s0, 908
  %s1698 = smov 192
  %v1699 = vld [vmem:[%s1697] ss:$16 sm:%s1698]
  %vm1700 = vcmask 1047558
  %v1701 = vsel %vm1700, %v1699, %v1696
  %1702 = vrot.lane.b32.xlu0 %v1701, 64
  %v1703 = vpop.permute.xlu0 %1702
  %vm1704 = vcmask 654848
  %s1705 = scalar_lea.vmem %s1, 120
  %1706 = vst.msk [vmem:[%s1705] sm:$0xff] %vm1704, %v1703
  %s1707 = scalar_lea.vmem %s0, 3
  %s1708 = smov 3
  %v1709 = vld [vmem:[%s1707] ss:$16 sm:%s1708]
  %s1710 = scalar_lea.vmem %s0, 3
  %s1711 = smov 12
  %v1712 = vld [vmem:[%s1710] ss:$16 sm:%s1711]
  %vm1713 = vcmask 1043458
  %v1714 = vsel %vm1713, %v1712, %v1709
  %s1715 = scalar_lea.vmem %s0, 3
  %s1716 = smov 48
  %v1717 = vld [vmem:[%s1715] ss:$16 sm:%s1716]
  %vm1718 = vcmask 1045508
  %v1719 = vsel %vm1718, %v1717, %v1714
  %s1720 = scalar_lea.vmem %s0, 3
  %s1721 = smov 192
  %v1722 = vld [vmem:[%s1720] ss:$16 sm:%s1721]
  %vm1723 = vcmask 1047558
  %v1724 = vsel %vm1723, %v1722, %v1719
  %1725 = vrot.lane.b32.xlu0 %v1724, 48
  %v1726 = vpop.permute.xlu0 %1725
  %vm1727 = vcmask 523648
  %1728 = vst.msk [vmem:[%s1] sm:$0xff] %vm1727, %v1726
  %s1729 = scalar_lea.vmem %s0, 259
  %s1730 = smov 3
  %v1731 = vld [vmem:[%s1729] ss:$16 sm:%s1730]
  %s1732 = scalar_lea.vmem %s0, 259
  %s1733 = smov 12
  %v1734 = vld [vmem:[%s1732] ss:$16 sm:%s1733]
  %vm1735 = vcmask 1043458
  %v1736 = vsel %vm1735, %v1734, %v1731
  %s1737 = scalar_lea.vmem %s0, 259
  %s1738 = smov 48
  %v1739 = vld [vmem:[%s1737] ss:$16 sm:%s1738]
  %vm1740 = vcmask 1045508
  %v1741 = vsel %vm1740, %v1739, %v1736
  %s1742 = scalar_lea.vmem %s0, 259
  %s1743 = smov 192
  %v1744 = vld [vmem:[%s1742] ss:$16 sm:%s1743]
  %vm1745 = vcmask 1047558
  %v1746 = vsel %vm1745, %v1744, %v1741
  %1747 = vrot.lane.b32.xlu0 %v1746, 48
  %v1748 = vpop.permute.xlu0 %1747
  %vm1749 = vcmask 523648
  %s1750 = scalar_lea.vmem %s1, 32
  %1751 = vst.msk [vmem:[%s1750] sm:$0xff] %vm1749, %v1748
  %s1752 = scalar_lea.vmem %s0, 515
  %s1753 = smov 3
  %v1754 = vld [vmem:[%s1752] ss:$16 sm:%s1753]
  %s1755 = scalar_lea.vmem %s0, 515
  %s1756 = smov 12
  %v1757 = vld [vmem:[%s1755] ss:$16 sm:%s1756]
  %vm1758 = vcmask 1043458
  %v1759 = vsel %vm1758, %v1757, %v1754
  %s1760 = scalar_lea.vmem %s0, 515
  %s1761 = smov 48
  %v1762 = vld [vmem:[%s1760] ss:$16 sm:%s1761]
  %vm1763 = vcmask 1045508
  %v1764 = vsel %vm1763, %v1762, %v1759
  %s1765 = scalar_lea.vmem %s0, 515
  %s1766 = smov 192
  %v1767 = vld [vmem:[%s1765] ss:$16 sm:%s1766]
  %vm1768 = vcmask 1047558
  %v1769 = vsel %vm1768, %v1767, %v1764
  %1770 = vrot.lane.b32.xlu0 %v1769, 48
  %v1771 = vpop.permute.xlu0 %1770
  %vm1772 = vcmask 523648
  %s1773 = scalar_lea.vmem %s1, 64
  %1774 = vst.msk [vmem:[%s1773] sm:$0xff] %vm1772, %v1771
  %s1775 = scalar_lea.vmem %s0, 771
  %s1776 = smov 3
  %v1777 = vld [vmem:[%s1775] ss:$16 sm:%s1776]
  %s1778 = scalar_lea.vmem %s0, 771
  %s1779 = smov 12
  %v1780 = vld [vmem:[%s1778] ss:$16 sm:%s1779]
  %vm1781 = vcmask 1043458
  %v1782 = vsel %vm1781, %v1780, %v1777
  %s1783 = scalar_lea.vmem %s0, 771
  %s1784 = smov 48
  %v1785 = vld [vmem:[%s1783] ss:$16 sm:%s1784]
  %vm1786 = vcmask 1045508
  %v1787 = vsel %vm1786, %v1785, %v1782
  %s1788 = scalar_lea.vmem %s0, 771
  %s1789 = smov 192
  %v1790 = vld [vmem:[%s1788] ss:$16 sm:%s1789]
  %vm1791 = vcmask 1047558
  %v1792 = vsel %vm1791, %v1790, %v1787
  %1793 = vrot.lane.b32.xlu0 %v1792, 48
  %v1794 = vpop.permute.xlu0 %1793
  %vm1795 = vcmask 523648
  %s1796 = scalar_lea.vmem %s1, 96
  %1797 = vst.msk [vmem:[%s1796] sm:$0xff] %vm1795, %v1794
  %s1798 = scalar_lea.vmem %s0, 11
  %s1799 = smov 3
  %v1800 = vld [vmem:[%s1798] ss:$16 sm:%s1799]
  %s1801 = scalar_lea.vmem %s0, 11
  %s1802 = smov 12
  %v1803 = vld [vmem:[%s1801] ss:$16 sm:%s1802]
  %vm1804 = vcmask 1043458
  %v1805 = vsel %vm1804, %v1803, %v1800
  %s1806 = scalar_lea.vmem %s0, 11
  %s1807 = smov 48
  %v1808 = vld [vmem:[%s1806] ss:$16 sm:%s1807]
  %vm1809 = vcmask 1045508
  %v1810 = vsel %vm1809, %v1808, %v1805
  %s1811 = scalar_lea.vmem %s0, 11
  %s1812 = smov 192
  %v1813 = vld [vmem:[%s1811] ss:$16 sm:%s1812]
  %vm1814 = vcmask 1047558
  %v1815 = vsel %vm1814, %v1813, %v1810
  %1816 = vrot.lane.b32.xlu0 %v1815, 48
  %v1817 = vpop.permute.xlu0 %1816
  %vm1818 = vcmask 523648
  %s1819 = scalar_lea.vmem %s1, 8
  %1820 = vst.msk [vmem:[%s1819] sm:$0xff] %vm1818, %v1817
  %s1821 = scalar_lea.vmem %s0, 267
  %s1822 = smov 3
  %v1823 = vld [vmem:[%s1821] ss:$16 sm:%s1822]
  %s1824 = scalar_lea.vmem %s0, 267
  %s1825 = smov 12
  %v1826 = vld [vmem:[%s1824] ss:$16 sm:%s1825]
  %vm1827 = vcmask 1043458
  %v1828 = vsel %vm1827, %v1826, %v1823
  %s1829 = scalar_lea.vmem %s0, 267
  %s1830 = smov 48
  %v1831 = vld [vmem:[%s1829] ss:$16 sm:%s1830]
  %vm1832 = vcmask 1045508
  %v1833 = vsel %vm1832, %v1831, %v1828
  %s1834 = scalar_lea.vmem %s0, 267
  %s1835 = smov 192
  %v1836 = vld [vmem:[%s1834] ss:$16 sm:%s1835]
  %vm1837 = vcmask 1047558
  %v1838 = vsel %vm1837, %v1836, %v1833
  %1839 = vrot.lane.b32.xlu0 %v1838, 48
  %v1840 = vpop.permute.xlu0 %1839
  %vm1841 = vcmask 523648
  %s1842 = scalar_lea.vmem %s1, 40
  %1843 = vst.msk [vmem:[%s1842] sm:$0xff] %vm1841, %v1840
  %s1844 = scalar_lea.vmem %s0, 523
  %s1845 = smov 3
  %v1846 = vld [vmem:[%s1844] ss:$16 sm:%s1845]
  %s1847 = scalar_lea.vmem %s0, 523
  %s1848 = smov 12
  %v1849 = vld [vmem:[%s1847] ss:$16 sm:%s1848]
  %vm1850 = vcmask 1043458
  %v1851 = vsel %vm1850, %v1849, %v1846
  %s1852 = scalar_lea.vmem %s0, 523
  %s1853 = smov 48
  %v1854 = vld [vmem:[%s1852] ss:$16 sm:%s1853]
  %vm1855 = vcmask 1045508
  %v1856 = vsel %vm1855, %v1854, %v1851
  %s1857 = scalar_lea.vmem %s0, 523
  %s1858 = smov 192
  %v1859 = vld [vmem:[%s1857] ss:$16 sm:%s1858]
  %vm1860 = vcmask 1047558
  %v1861 = vsel %vm1860, %v1859, %v1856
  %1862 = vrot.lane.b32.xlu0 %v1861, 48
  %v1863 = vpop.permute.xlu0 %1862
  %vm1864 = vcmask 523648
  %s1865 = scalar_lea.vmem %s1, 72
  %1866 = vst.msk [vmem:[%s1865] sm:$0xff] %vm1864, %v1863
  %s1867 = scalar_lea.vmem %s0, 779
  %s1868 = smov 3
  %v1869 = vld [vmem:[%s1867] ss:$16 sm:%s1868]
  %s1870 = scalar_lea.vmem %s0, 779
  %s1871 = smov 12
  %v1872 = vld [vmem:[%s1870] ss:$16 sm:%s1871]
  %vm1873 = vcmask 1043458
  %v1874 = vsel %vm1873, %v1872, %v1869
  %s1875 = scalar_lea.vmem %s0, 779
  %s1876 = smov 48
  %v1877 = vld [vmem:[%s1875] ss:$16 sm:%s1876]
  %vm1878 = vcmask 1045508
  %v1879 = vsel %vm1878, %v1877, %v1874
  %s1880 = scalar_lea.vmem %s0, 779
  %s1881 = smov 192
  %v1882 = vld [vmem:[%s1880] ss:$16 sm:%s1881]
  %vm1883 = vcmask 1047558
  %v1884 = vsel %vm1883, %v1882, %v1879
  %1885 = vrot.lane.b32.xlu0 %v1884, 48
  %v1886 = vpop.permute.xlu0 %1885
  %vm1887 = vcmask 523648
  %s1888 = scalar_lea.vmem %s1, 104
  %1889 = vst.msk [vmem:[%s1888] sm:$0xff] %vm1887, %v1886
  %s1890 = scalar_lea.vmem %s0, 131
  %s1891 = smov 3
  %v1892 = vld [vmem:[%s1890] ss:$16 sm:%s1891]
  %s1893 = scalar_lea.vmem %s0, 131
  %s1894 = smov 12
  %v1895 = vld [vmem:[%s1893] ss:$16 sm:%s1894]
  %vm1896 = vcmask 1043458
  %v1897 = vsel %vm1896, %v1895, %v1892
  %s1898 = scalar_lea.vmem %s0, 131
  %s1899 = smov 48
  %v1900 = vld [vmem:[%s1898] ss:$16 sm:%s1899]
  %vm1901 = vcmask 1045508
  %v1902 = vsel %vm1901, %v1900, %v1897
  %s1903 = scalar_lea.vmem %s0, 131
  %s1904 = smov 192
  %v1905 = vld [vmem:[%s1903] ss:$16 sm:%s1904]
  %vm1906 = vcmask 1047558
  %v1907 = vsel %vm1906, %v1905, %v1902
  %1908 = vrot.lane.b32.xlu0 %v1907, 48
  %v1909 = vpop.permute.xlu0 %1908
  %vm1910 = vcmask 523648
  %s1911 = scalar_lea.vmem %s1, 16
  %1912 = vst.msk [vmem:[%s1911] sm:$0xff] %vm1910, %v1909
  %s1913 = scalar_lea.vmem %s0, 387
  %s1914 = smov 3
  %v1915 = vld [vmem:[%s1913] ss:$16 sm:%s1914]
  %s1916 = scalar_lea.vmem %s0, 387
  %s1917 = smov 12
  %v1918 = vld [vmem:[%s1916] ss:$16 sm:%s1917]
  %vm1919 = vcmask 1043458
  %v1920 = vsel %vm1919, %v1918, %v1915
  %s1921 = scalar_lea.vmem %s0, 387
  %s1922 = smov 48
  %v1923 = vld [vmem:[%s1921] ss:$16 sm:%s1922]
  %vm1924 = vcmask 1045508
  %v1925 = vsel %vm1924, %v1923, %v1920
  %s1926 = scalar_lea.vmem %s0, 387
  %s1927 = smov 192
  %v1928 = vld [vmem:[%s1926] ss:$16 sm:%s1927]
  %vm1929 = vcmask 1047558
  %v1930 = vsel %vm1929, %v1928, %v1925
  %1931 = vrot.lane.b32.xlu0 %v1930, 48
  %v1932 = vpop.permute.xlu0 %1931
  %vm1933 = vcmask 523648
  %s1934 = scalar_lea.vmem %s1, 48
  %1935 = vst.msk [vmem:[%s1934] sm:$0xff] %vm1933, %v1932
  %s1936 = scalar_lea.vmem %s0, 643
  %s1937 = smov 3
  %v1938 = vld [vmem:[%s1936] ss:$16 sm:%s1937]
  %s1939 = scalar_lea.vmem %s0, 643
  %s1940 = smov 12
  %v1941 = vld [vmem:[%s1939] ss:$16 sm:%s1940]
  %vm1942 = vcmask 1043458
  %v1943 = vsel %vm1942, %v1941, %v1938
  %s1944 = scalar_lea.vmem %s0, 643
  %s1945 = smov 48
  %v1946 = vld [vmem:[%s1944] ss:$16 sm:%s1945]
  %vm1947 = vcmask 1045508
  %v1948 = vsel %vm1947, %v1946, %v1943
  %s1949 = scalar_lea.vmem %s0, 643
  %s1950 = smov 192
  %v1951 = vld [vmem:[%s1949] ss:$16 sm:%s1950]
  %vm1952 = vcmask 1047558
  %v1953 = vsel %vm1952, %v1951, %v1948
  %1954 = vrot.lane.b32.xlu0 %v1953, 48
  %v1955 = vpop.permute.xlu0 %1954
  %vm1956 = vcmask 523648
  %s1957 = scalar_lea.vmem %s1, 80
  %1958 = vst.msk [vmem:[%s1957] sm:$0xff] %vm1956, %v1955
  %s1959 = scalar_lea.vmem %s0, 899
  %s1960 = smov 3
  %v1961 = vld [vmem:[%s1959] ss:$16 sm:%s1960]
  %s1962 = scalar_lea.vmem %s0, 899
  %s1963 = smov 12
  %v1964 = vld [vmem:[%s1962] ss:$16 sm:%s1963]
  %vm1965 = vcmask 1043458
  %v1966 = vsel %vm1965, %v1964, %v1961
  %s1967 = scalar_lea.vmem %s0, 899
  %s1968 = smov 48
  %v1969 = vld [vmem:[%s1967] ss:$16 sm:%s1968]
  %vm1970 = vcmask 1045508
  %v1971 = vsel %vm1970, %v1969, %v1966
  %s1972 = scalar_lea.vmem %s0, 899
  %s1973 = smov 192
  %v1974 = vld [vmem:[%s1972] ss:$16 sm:%s1973]
  %vm1975 = vcmask 1047558
  %v1976 = vsel %vm1975, %v1974, %v1971
  %1977 = vrot.lane.b32.xlu0 %v1976, 48
  %v1978 = vpop.permute.xlu0 %1977
  %vm1979 = vcmask 523648
  %s1980 = scalar_lea.vmem %s1, 112
  %1981 = vst.msk [vmem:[%s1980] sm:$0xff] %vm1979, %v1978
  %s1982 = scalar_lea.vmem %s0, 139
  %s1983 = smov 3
  %v1984 = vld [vmem:[%s1982] ss:$16 sm:%s1983]
  %s1985 = scalar_lea.vmem %s0, 139
  %s1986 = smov 12
  %v1987 = vld [vmem:[%s1985] ss:$16 sm:%s1986]
  %vm1988 = vcmask 1043458
  %v1989 = vsel %vm1988, %v1987, %v1984
  %s1990 = scalar_lea.vmem %s0, 139
  %s1991 = smov 48
  %v1992 = vld [vmem:[%s1990] ss:$16 sm:%s1991]
  %vm1993 = vcmask 1045508
  %v1994 = vsel %vm1993, %v1992, %v1989
  %s1995 = scalar_lea.vmem %s0, 139
  %s1996 = smov 192
  %v1997 = vld [vmem:[%s1995] ss:$16 sm:%s1996]
  %vm1998 = vcmask 1047558
  %v1999 = vsel %vm1998, %v1997, %v1994
  %2000 = vrot.lane.b32.xlu0 %v1999, 48
  %v2001 = vpop.permute.xlu0 %2000
  %vm2002 = vcmask 523648
  %s2003 = scalar_lea.vmem %s1, 24
  %2004 = vst.msk [vmem:[%s2003] sm:$0xff] %vm2002, %v2001
  %s2005 = scalar_lea.vmem %s0, 395
  %s2006 = smov 3
  %v2007 = vld [vmem:[%s2005] ss:$16 sm:%s2006]
  %s2008 = scalar_lea.vmem %s0, 395
  %s2009 = smov 12
  %v2010 = vld [vmem:[%s2008] ss:$16 sm:%s2009]
  %vm2011 = vcmask 1043458
  %v2012 = vsel %vm2011, %v2010, %v2007
  %s2013 = scalar_lea.vmem %s0, 395
  %s2014 = smov 48
  %v2015 = vld [vmem:[%s2013] ss:$16 sm:%s2014]
  %vm2016 = vcmask 1045508
  %v2017 = vsel %vm2016, %v2015, %v2012
  %s2018 = scalar_lea.vmem %s0, 395
  %s2019 = smov 192
  %v2020 = vld [vmem:[%s2018] ss:$16 sm:%s2019]
  %vm2021 = vcmask 1047558
  %v2022 = vsel %vm2021, %v2020, %v2017
  %2023 = vrot.lane.b32.xlu0 %v2022, 48
  %v2024 = vpop.permute.xlu0 %2023
  %vm2025 = vcmask 523648
  %s2026 = scalar_lea.vmem %s1, 56
  %2027 = vst.msk [vmem:[%s2026] sm:$0xff] %vm2025, %v2024
  %s2028 = scalar_lea.vmem %s0, 651
  %s2029 = smov 3
  %v2030 = vld [vmem:[%s2028] ss:$16 sm:%s2029]
  %s2031 = scalar_lea.vmem %s0, 651
  %s2032 = smov 12
  %v2033 = vld [vmem:[%s2031] ss:$16 sm:%s2032]
  %vm2034 = vcmask 1043458
  %v2035 = vsel %vm2034, %v2033, %v2030
  %s2036 = scalar_lea.vmem %s0, 651
  %s2037 = smov 48
  %v2038 = vld [vmem:[%s2036] ss:$16 sm:%s2037]
  %vm2039 = vcmask 1045508
  %v2040 = vsel %vm2039, %v2038, %v2035
  %s2041 = scalar_lea.vmem %s0, 651
  %s2042 = smov 192
  %v2043 = vld [vmem:[%s2041] ss:$16 sm:%s2042]
  %vm2044 = vcmask 1047558
  %v2045 = vsel %vm2044, %v2043, %v2040
  %2046 = vrot.lane.b32.xlu0 %v2045, 48
  %v2047 = vpop.permute.xlu0 %2046
  %vm2048 = vcmask 523648
  %s2049 = scalar_lea.vmem %s1, 88
  %2050 = vst.msk [vmem:[%s2049] sm:$0xff] %vm2048, %v2047
  %s2051 = scalar_lea.vmem %s0, 907
  %s2052 = smov 3
  %v2053 = vld [vmem:[%s2051] ss:$16 sm:%s2052]
  %s2054 = scalar_lea.vmem %s0, 907
  %s2055 = smov 12
  %v2056 = vld [vmem:[%s2054] ss:$16 sm:%s2055]
  %vm2057 = vcmask 1043458
  %v2058 = vsel %vm2057, %v2056, %v2053
  %s2059 = scalar_lea.vmem %s0, 907
  %s2060 = smov 48
  %v2061 = vld [vmem:[%s2059] ss:$16 sm:%s2060]
  %vm2062 = vcmask 1045508
  %v2063 = vsel %vm2062, %v2061, %v2058
  %s2064 = scalar_lea.vmem %s0, 907
  %s2065 = smov 192
  %v2066 = vld [vmem:[%s2064] ss:$16 sm:%s2065]
  %vm2067 = vcmask 1047558
  %v2068 = vsel %vm2067, %v2066, %v2063
  %2069 = vrot.lane.b32.xlu0 %v2068, 48
  %v2070 = vpop.permute.xlu0 %2069
  %vm2071 = vcmask 523648
  %s2072 = scalar_lea.vmem %s1, 120
  %2073 = vst.msk [vmem:[%s2072] sm:$0xff] %vm2071, %v2070
  %s2074 = scalar_lea.vmem %s0, 2
  %s2075 = smov 3
  %v2076 = vld [vmem:[%s2074] ss:$16 sm:%s2075]
  %s2077 = scalar_lea.vmem %s0, 2
  %s2078 = smov 12
  %v2079 = vld [vmem:[%s2077] ss:$16 sm:%s2078]
  %vm2080 = vcmask 1043458
  %v2081 = vsel %vm2080, %v2079, %v2076
  %s2082 = scalar_lea.vmem %s0, 2
  %s2083 = smov 48
  %v2084 = vld [vmem:[%s2082] ss:$16 sm:%s2083]
  %vm2085 = vcmask 1045508
  %v2086 = vsel %vm2085, %v2084, %v2081
  %s2087 = scalar_lea.vmem %s0, 2
  %s2088 = smov 192
  %v2089 = vld [vmem:[%s2087] ss:$16 sm:%s2088]
  %vm2090 = vcmask 1047558
  %v2091 = vsel %vm2090, %v2089, %v2086
  %2092 = vrot.lane.b32.xlu0 %v2091, 32
  %v2093 = vpop.permute.xlu0 %2092
  %vm2094 = vcmask 392448
  %2095 = vst.msk [vmem:[%s1] sm:$0xff] %vm2094, %v2093
  %s2096 = scalar_lea.vmem %s0, 258
  %s2097 = smov 3
  %v2098 = vld [vmem:[%s2096] ss:$16 sm:%s2097]
  %s2099 = scalar_lea.vmem %s0, 258
  %s2100 = smov 12
  %v2101 = vld [vmem:[%s2099] ss:$16 sm:%s2100]
  %vm2102 = vcmask 1043458
  %v2103 = vsel %vm2102, %v2101, %v2098
  %s2104 = scalar_lea.vmem %s0, 258
  %s2105 = smov 48
  %v2106 = vld [vmem:[%s2104] ss:$16 sm:%s2105]
  %vm2107 = vcmask 1045508
  %v2108 = vsel %vm2107, %v2106, %v2103
  %s2109 = scalar_lea.vmem %s0, 258
  %s2110 = smov 192
  %v2111 = vld [vmem:[%s2109] ss:$16 sm:%s2110]
  %vm2112 = vcmask 1047558
  %v2113 = vsel %vm2112, %v2111, %v2108
  %2114 = vrot.lane.b32.xlu0 %v2113, 32
  %v2115 = vpop.permute.xlu0 %2114
  %vm2116 = vcmask 392448
  %s2117 = scalar_lea.vmem %s1, 32
  %2118 = vst.msk [vmem:[%s2117] sm:$0xff] %vm2116, %v2115
  %s2119 = scalar_lea.vmem %s0, 514
  %s2120 = smov 3
  %v2121 = vld [vmem:[%s2119] ss:$16 sm:%s2120]
  %s2122 = scalar_lea.vmem %s0, 514
  %s2123 = smov 12
  %v2124 = vld [vmem:[%s2122] ss:$16 sm:%s2123]
  %vm2125 = vcmask 1043458
  %v2126 = vsel %vm2125, %v2124, %v2121
  %s2127 = scalar_lea.vmem %s0, 514
  %s2128 = smov 48
  %v2129 = vld [vmem:[%s2127] ss:$16 sm:%s2128]
  %vm2130 = vcmask 1045508
  %v2131 = vsel %vm2130, %v2129, %v2126
  %s2132 = scalar_lea.vmem %s0, 514
  %s2133 = smov 192
  %v2134 = vld [vmem:[%s2132] ss:$16 sm:%s2133]
  %vm2135 = vcmask 1047558
  %v2136 = vsel %vm2135, %v2134, %v2131
  %2137 = vrot.lane.b32.xlu0 %v2136, 32
  %v2138 = vpop.permute.xlu0 %2137
  %vm2139 = vcmask 392448
  %s2140 = scalar_lea.vmem %s1, 64
  %2141 = vst.msk [vmem:[%s2140] sm:$0xff] %vm2139, %v2138
  %s2142 = scalar_lea.vmem %s0, 770
  %s2143 = smov 3
  %v2144 = vld [vmem:[%s2142] ss:$16 sm:%s2143]
  %s2145 = scalar_lea.vmem %s0, 770
  %s2146 = smov 12
  %v2147 = vld [vmem:[%s2145] ss:$16 sm:%s2146]
  %vm2148 = vcmask 1043458
  %v2149 = vsel %vm2148, %v2147, %v2144
  %s2150 = scalar_lea.vmem %s0, 770
  %s2151 = smov 48
  %v2152 = vld [vmem:[%s2150] ss:$16 sm:%s2151]
  %vm2153 = vcmask 1045508
  %v2154 = vsel %vm2153, %v2152, %v2149
  %s2155 = scalar_lea.vmem %s0, 770
  %s2156 = smov 192
  %v2157 = vld [vmem:[%s2155] ss:$16 sm:%s2156]
  %vm2158 = vcmask 1047558
  %v2159 = vsel %vm2158, %v2157, %v2154
  %2160 = vrot.lane.b32.xlu0 %v2159, 32
  %v2161 = vpop.permute.xlu0 %2160
  %vm2162 = vcmask 392448
  %s2163 = scalar_lea.vmem %s1, 96
  %2164 = vst.msk [vmem:[%s2163] sm:$0xff] %vm2162, %v2161
  %s2165 = scalar_lea.vmem %s0, 10
  %s2166 = smov 3
  %v2167 = vld [vmem:[%s2165] ss:$16 sm:%s2166]
  %s2168 = scalar_lea.vmem %s0, 10
  %s2169 = smov 12
  %v2170 = vld [vmem:[%s2168] ss:$16 sm:%s2169]
  %vm2171 = vcmask 1043458
  %v2172 = vsel %vm2171, %v2170, %v2167
  %s2173 = scalar_lea.vmem %s0, 10
  %s2174 = smov 48
  %v2175 = vld [vmem:[%s2173] ss:$16 sm:%s2174]
  %vm2176 = vcmask 1045508
  %v2177 = vsel %vm2176, %v2175, %v2172
  %s2178 = scalar_lea.vmem %s0, 10
  %s2179 = smov 192
  %v2180 = vld [vmem:[%s2178] ss:$16 sm:%s2179]
  %vm2181 = vcmask 1047558
  %v2182 = vsel %vm2181, %v2180, %v2177
  %2183 = vrot.lane.b32.xlu0 %v2182, 32
  %v2184 = vpop.permute.xlu0 %2183
  %vm2185 = vcmask 392448
  %s2186 = scalar_lea.vmem %s1, 8
  %2187 = vst.msk [vmem:[%s2186] sm:$0xff] %vm2185, %v2184
  %s2188 = scalar_lea.vmem %s0, 266
  %s2189 = smov 3
  %v2190 = vld [vmem:[%s2188] ss:$16 sm:%s2189]
  %s2191 = scalar_lea.vmem %s0, 266
  %s2192 = smov 12
  %v2193 = vld [vmem:[%s2191] ss:$16 sm:%s2192]
  %vm2194 = vcmask 1043458
  %v2195 = vsel %vm2194, %v2193, %v2190
  %s2196 = scalar_lea.vmem %s0, 266
  %s2197 = smov 48
  %v2198 = vld [vmem:[%s2196] ss:$16 sm:%s2197]
  %vm2199 = vcmask 1045508
  %v2200 = vsel %vm2199, %v2198, %v2195
  %s2201 = scalar_lea.vmem %s0, 266
  %s2202 = smov 192
  %v2203 = vld [vmem:[%s2201] ss:$16 sm:%s2202]
  %vm2204 = vcmask 1047558
  %v2205 = vsel %vm2204, %v2203, %v2200
  %2206 = vrot.lane.b32.xlu0 %v2205, 32
  %v2207 = vpop.permute.xlu0 %2206
  %vm2208 = vcmask 392448
  %s2209 = scalar_lea.vmem %s1, 40
  %2210 = vst.msk [vmem:[%s2209] sm:$0xff] %vm2208, %v2207
  %s2211 = scalar_lea.vmem %s0, 522
  %s2212 = smov 3
  %v2213 = vld [vmem:[%s2211] ss:$16 sm:%s2212]
  %s2214 = scalar_lea.vmem %s0, 522
  %s2215 = smov 12
  %v2216 = vld [vmem:[%s2214] ss:$16 sm:%s2215]
  %vm2217 = vcmask 1043458
  %v2218 = vsel %vm2217, %v2216, %v2213
  %s2219 = scalar_lea.vmem %s0, 522
  %s2220 = smov 48
  %v2221 = vld [vmem:[%s2219] ss:$16 sm:%s2220]
  %vm2222 = vcmask 1045508
  %v2223 = vsel %vm2222, %v2221, %v2218
  %s2224 = scalar_lea.vmem %s0, 522
  %s2225 = smov 192
  %v2226 = vld [vmem:[%s2224] ss:$16 sm:%s2225]
  %vm2227 = vcmask 1047558
  %v2228 = vsel %vm2227, %v2226, %v2223
  %2229 = vrot.lane.b32.xlu0 %v2228, 32
  %v2230 = vpop.permute.xlu0 %2229
  %vm2231 = vcmask 392448
  %s2232 = scalar_lea.vmem %s1, 72
  %2233 = vst.msk [vmem:[%s2232] sm:$0xff] %vm2231, %v2230
  %s2234 = scalar_lea.vmem %s0, 778
  %s2235 = smov 3
  %v2236 = vld [vmem:[%s2234] ss:$16 sm:%s2235]
  %s2237 = scalar_lea.vmem %s0, 778
  %s2238 = smov 12
  %v2239 = vld [vmem:[%s2237] ss:$16 sm:%s2238]
  %vm2240 = vcmask 1043458
  %v2241 = vsel %vm2240, %v2239, %v2236
  %s2242 = scalar_lea.vmem %s0, 778
  %s2243 = smov 48
  %v2244 = vld [vmem:[%s2242] ss:$16 sm:%s2243]
  %vm2245 = vcmask 1045508
  %v2246 = vsel %vm2245, %v2244, %v2241
  %s2247 = scalar_lea.vmem %s0, 778
  %s2248 = smov 192
  %v2249 = vld [vmem:[%s2247] ss:$16 sm:%s2248]
  %vm2250 = vcmask 1047558
  %v2251 = vsel %vm2250, %v2249, %v2246
  %2252 = vrot.lane.b32.xlu0 %v2251, 32
  %v2253 = vpop.permute.xlu0 %2252
  %vm2254 = vcmask 392448
  %s2255 = scalar_lea.vmem %s1, 104
  %2256 = vst.msk [vmem:[%s2255] sm:$0xff] %vm2254, %v2253
  %s2257 = scalar_lea.vmem %s0, 130
  %s2258 = smov 3
  %v2259 = vld [vmem:[%s2257] ss:$16 sm:%s2258]
  %s2260 = scalar_lea.vmem %s0, 130
  %s2261 = smov 12
  %v2262 = vld [vmem:[%s2260] ss:$16 sm:%s2261]
  %vm2263 = vcmask 1043458
  %v2264 = vsel %vm2263, %v2262, %v2259
  %s2265 = scalar_lea.vmem %s0, 130
  %s2266 = smov 48
  %v2267 = vld [vmem:[%s2265] ss:$16 sm:%s2266]
  %vm2268 = vcmask 1045508
  %v2269 = vsel %vm2268, %v2267, %v2264
  %s2270 = scalar_lea.vmem %s0, 130
  %s2271 = smov 192
  %v2272 = vld [vmem:[%s2270] ss:$16 sm:%s2271]
  %vm2273 = vcmask 1047558
  %v2274 = vsel %vm2273, %v2272, %v2269
  %2275 = vrot.lane.b32.xlu0 %v2274, 32
  %v2276 = vpop.permute.xlu0 %2275
  %vm2277 = vcmask 392448
  %s2278 = scalar_lea.vmem %s1, 16
  %2279 = vst.msk [vmem:[%s2278] sm:$0xff] %vm2277, %v2276
  %s2280 = scalar_lea.vmem %s0, 386
  %s2281 = smov 3
  %v2282 = vld [vmem:[%s2280] ss:$16 sm:%s2281]
  %s2283 = scalar_lea.vmem %s0, 386
  %s2284 = smov 12
  %v2285 = vld [vmem:[%s2283] ss:$16 sm:%s2284]
  %vm2286 = vcmask 1043458
  %v2287 = vsel %vm2286, %v2285, %v2282
  %s2288 = scalar_lea.vmem %s0, 386
  %s2289 = smov 48
  %v2290 = vld [vmem:[%s2288] ss:$16 sm:%s2289]
  %vm2291 = vcmask 1045508
  %v2292 = vsel %vm2291, %v2290, %v2287
  %s2293 = scalar_lea.vmem %s0, 386
  %s2294 = smov 192
  %v2295 = vld [vmem:[%s2293] ss:$16 sm:%s2294]
  %vm2296 = vcmask 1047558
  %v2297 = vsel %vm2296, %v2295, %v2292
  %2298 = vrot.lane.b32.xlu0 %v2297, 32
  %v2299 = vpop.permute.xlu0 %2298
  %vm2300 = vcmask 392448
  %s2301 = scalar_lea.vmem %s1, 48
  %2302 = vst.msk [vmem:[%s2301] sm:$0xff] %vm2300, %v2299
  %s2303 = scalar_lea.vmem %s0, 642
  %s2304 = smov 3
  %v2305 = vld [vmem:[%s2303] ss:$16 sm:%s2304]
  %s2306 = scalar_lea.vmem %s0, 642
  %s2307 = smov 12
  %v2308 = vld [vmem:[%s2306] ss:$16 sm:%s2307]
  %vm2309 = vcmask 1043458
  %v2310 = vsel %vm2309, %v2308, %v2305
  %s2311 = scalar_lea.vmem %s0, 642
  %s2312 = smov 48
  %v2313 = vld [vmem:[%s2311] ss:$16 sm:%s2312]
  %vm2314 = vcmask 1045508
  %v2315 = vsel %vm2314, %v2313, %v2310
  %s2316 = scalar_lea.vmem %s0, 642
  %s2317 = smov 192
  %v2318 = vld [vmem:[%s2316] ss:$16 sm:%s2317]
  %vm2319 = vcmask 1047558
  %v2320 = vsel %vm2319, %v2318, %v2315
  %2321 = vrot.lane.b32.xlu0 %v2320, 32
  %v2322 = vpop.permute.xlu0 %2321
  %vm2323 = vcmask 392448
  %s2324 = scalar_lea.vmem %s1, 80
  %2325 = vst.msk [vmem:[%s2324] sm:$0xff] %vm2323, %v2322
  %s2326 = scalar_lea.vmem %s0, 898
  %s2327 = smov 3
  %v2328 = vld [vmem:[%s2326] ss:$16 sm:%s2327]
  %s2329 = scalar_lea.vmem %s0, 898
  %s2330 = smov 12
  %v2331 = vld [vmem:[%s2329] ss:$16 sm:%s2330]
  %vm2332 = vcmask 1043458
  %v2333 = vsel %vm2332, %v2331, %v2328
  %s2334 = scalar_lea.vmem %s0, 898
  %s2335 = smov 48
  %v2336 = vld [vmem:[%s2334] ss:$16 sm:%s2335]
  %vm2337 = vcmask 1045508
  %v2338 = vsel %vm2337, %v2336, %v2333
  %s2339 = scalar_lea.vmem %s0, 898
  %s2340 = smov 192
  %v2341 = vld [vmem:[%s2339] ss:$16 sm:%s2340]
  %vm2342 = vcmask 1047558
  %v2343 = vsel %vm2342, %v2341, %v2338
  %2344 = vrot.lane.b32.xlu0 %v2343, 32
  %v2345 = vpop.permute.xlu0 %2344
  %vm2346 = vcmask 392448
  %s2347 = scalar_lea.vmem %s1, 112
  %2348 = vst.msk [vmem:[%s2347] sm:$0xff] %vm2346, %v2345
  %s2349 = scalar_lea.vmem %s0, 138
  %s2350 = smov 3
  %v2351 = vld [vmem:[%s2349] ss:$16 sm:%s2350]
  %s2352 = scalar_lea.vmem %s0, 138
  %s2353 = smov 12
  %v2354 = vld [vmem:[%s2352] ss:$16 sm:%s2353]
  %vm2355 = vcmask 1043458
  %v2356 = vsel %vm2355, %v2354, %v2351
  %s2357 = scalar_lea.vmem %s0, 138
  %s2358 = smov 48
  %v2359 = vld [vmem:[%s2357] ss:$16 sm:%s2358]
  %vm2360 = vcmask 1045508
  %v2361 = vsel %vm2360, %v2359, %v2356
  %s2362 = scalar_lea.vmem %s0, 138
  %s2363 = smov 192
  %v2364 = vld [vmem:[%s2362] ss:$16 sm:%s2363]
  %vm2365 = vcmask 1047558
  %v2366 = vsel %vm2365, %v2364, %v2361
  %2367 = vrot.lane.b32.xlu0 %v2366, 32
  %v2368 = vpop.permute.xlu0 %2367
  %vm2369 = vcmask 392448
  %s2370 = scalar_lea.vmem %s1, 24
  %2371 = vst.msk [vmem:[%s2370] sm:$0xff] %vm2369, %v2368
  %s2372 = scalar_lea.vmem %s0, 394
  %s2373 = smov 3
  %v2374 = vld [vmem:[%s2372] ss:$16 sm:%s2373]
  %s2375 = scalar_lea.vmem %s0, 394
  %s2376 = smov 12
  %v2377 = vld [vmem:[%s2375] ss:$16 sm:%s2376]
  %vm2378 = vcmask 1043458
  %v2379 = vsel %vm2378, %v2377, %v2374
  %s2380 = scalar_lea.vmem %s0, 394
  %s2381 = smov 48
  %v2382 = vld [vmem:[%s2380] ss:$16 sm:%s2381]
  %vm2383 = vcmask 1045508
  %v2384 = vsel %vm2383, %v2382, %v2379
  %s2385 = scalar_lea.vmem %s0, 394
  %s2386 = smov 192
  %v2387 = vld [vmem:[%s2385] ss:$16 sm:%s2386]
  %vm2388 = vcmask 1047558
  %v2389 = vsel %vm2388, %v2387, %v2384
  %2390 = vrot.lane.b32.xlu0 %v2389, 32
  %v2391 = vpop.permute.xlu0 %2390
  %vm2392 = vcmask 392448
  %s2393 = scalar_lea.vmem %s1, 56
  %2394 = vst.msk [vmem:[%s2393] sm:$0xff] %vm2392, %v2391
  %s2395 = scalar_lea.vmem %s0, 650
  %s2396 = smov 3
  %v2397 = vld [vmem:[%s2395] ss:$16 sm:%s2396]
  %s2398 = scalar_lea.vmem %s0, 650
  %s2399 = smov 12
  %v2400 = vld [vmem:[%s2398] ss:$16 sm:%s2399]
  %vm2401 = vcmask 1043458
  %v2402 = vsel %vm2401, %v2400, %v2397
  %s2403 = scalar_lea.vmem %s0, 650
  %s2404 = smov 48
  %v2405 = vld [vmem:[%s2403] ss:$16 sm:%s2404]
  %vm2406 = vcmask 1045508
  %v2407 = vsel %vm2406, %v2405, %v2402
  %s2408 = scalar_lea.vmem %s0, 650
  %s2409 = smov 192
  %v2410 = vld [vmem:[%s2408] ss:$16 sm:%s2409]
  %vm2411 = vcmask 1047558
  %v2412 = vsel %vm2411, %v2410, %v2407
  %2413 = vrot.lane.b32.xlu0 %v2412, 32
  %v2414 = vpop.permute.xlu0 %2413
  %vm2415 = vcmask 392448
  %s2416 = scalar_lea.vmem %s1, 88
  %2417 = vst.msk [vmem:[%s2416] sm:$0xff] %vm2415, %v2414
  %s2418 = scalar_lea.vmem %s0, 906
  %s2419 = smov 3
  %v2420 = vld [vmem:[%s2418] ss:$16 sm:%s2419]
  %s2421 = scalar_lea.vmem %s0, 906
  %s2422 = smov 12
  %v2423 = vld [vmem:[%s2421] ss:$16 sm:%s2422]
  %vm2424 = vcmask 1043458
  %v2425 = vsel %vm2424, %v2423, %v2420
  %s2426 = scalar_lea.vmem %s0, 906
  %s2427 = smov 48
  %v2428 = vld [vmem:[%s2426] ss:$16 sm:%s2427]
  %vm2429 = vcmask 1045508
  %v2430 = vsel %vm2429, %v2428, %v2425
  %s2431 = scalar_lea.vmem %s0, 906
  %s2432 = smov 192
  %v2433 = vld [vmem:[%s2431] ss:$16 sm:%s2432]
  %vm2434 = vcmask 1047558
  %v2435 = vsel %vm2434, %v2433, %v2430
  %2436 = vrot.lane.b32.xlu0 %v2435, 32
  %v2437 = vpop.permute.xlu0 %2436
  %vm2438 = vcmask 392448
  %s2439 = scalar_lea.vmem %s1, 120
  %2440 = vst.msk [vmem:[%s2439] sm:$0xff] %vm2438, %v2437
  %s2441 = scalar_lea.vmem %s0, 1
  %s2442 = smov 3
  %v2443 = vld [vmem:[%s2441] ss:$16 sm:%s2442]
  %s2444 = scalar_lea.vmem %s0, 1
  %s2445 = smov 12
  %v2446 = vld [vmem:[%s2444] ss:$16 sm:%s2445]
  %vm2447 = vcmask 1043458
  %v2448 = vsel %vm2447, %v2446, %v2443
  %s2449 = scalar_lea.vmem %s0, 1
  %s2450 = smov 48
  %v2451 = vld [vmem:[%s2449] ss:$16 sm:%s2450]
  %vm2452 = vcmask 1045508
  %v2453 = vsel %vm2452, %v2451, %v2448
  %s2454 = scalar_lea.vmem %s0, 1
  %s2455 = smov 192
  %v2456 = vld [vmem:[%s2454] ss:$16 sm:%s2455]
  %vm2457 = vcmask 1047558
  %v2458 = vsel %vm2457, %v2456, %v2453
  %2459 = vrot.lane.b32.xlu0 %v2458, 16
  %v2460 = vpop.permute.xlu0 %2459
  %vm2461 = vcmask 261248
  %2462 = vst.msk [vmem:[%s1] sm:$0xff] %vm2461, %v2460
  %s2463 = scalar_lea.vmem %s0, 257
  %s2464 = smov 3
  %v2465 = vld [vmem:[%s2463] ss:$16 sm:%s2464]
  %s2466 = scalar_lea.vmem %s0, 257
  %s2467 = smov 12
  %v2468 = vld [vmem:[%s2466] ss:$16 sm:%s2467]
  %vm2469 = vcmask 1043458
  %v2470 = vsel %vm2469, %v2468, %v2465
  %s2471 = scalar_lea.vmem %s0, 257
  %s2472 = smov 48
  %v2473 = vld [vmem:[%s2471] ss:$16 sm:%s2472]
  %vm2474 = vcmask 1045508
  %v2475 = vsel %vm2474, %v2473, %v2470
  %s2476 = scalar_lea.vmem %s0, 257
  %s2477 = smov 192
  %v2478 = vld [vmem:[%s2476] ss:$16 sm:%s2477]
  %vm2479 = vcmask 1047558
  %v2480 = vsel %vm2479, %v2478, %v2475
  %2481 = vrot.lane.b32.xlu0 %v2480, 16
  %v2482 = vpop.permute.xlu0 %2481
  %vm2483 = vcmask 261248
  %s2484 = scalar_lea.vmem %s1, 32
  %2485 = vst.msk [vmem:[%s2484] sm:$0xff] %vm2483, %v2482
  %s2486 = scalar_lea.vmem %s0, 513
  %s2487 = smov 3
  %v2488 = vld [vmem:[%s2486] ss:$16 sm:%s2487]
  %s2489 = scalar_lea.vmem %s0, 513
  %s2490 = smov 12
  %v2491 = vld [vmem:[%s2489] ss:$16 sm:%s2490]
  %vm2492 = vcmask 1043458
  %v2493 = vsel %vm2492, %v2491, %v2488
  %s2494 = scalar_lea.vmem %s0, 513
  %s2495 = smov 48
  %v2496 = vld [vmem:[%s2494] ss:$16 sm:%s2495]
  %vm2497 = vcmask 1045508
  %v2498 = vsel %vm2497, %v2496, %v2493
  %s2499 = scalar_lea.vmem %s0, 513
  %s2500 = smov 192
  %v2501 = vld [vmem:[%s2499] ss:$16 sm:%s2500]
  %vm2502 = vcmask 1047558
  %v2503 = vsel %vm2502, %v2501, %v2498
  %2504 = vrot.lane.b32.xlu0 %v2503, 16
  %v2505 = vpop.permute.xlu0 %2504
  %vm2506 = vcmask 261248
  %s2507 = scalar_lea.vmem %s1, 64
  %2508 = vst.msk [vmem:[%s2507] sm:$0xff] %vm2506, %v2505
  %s2509 = scalar_lea.vmem %s0, 769
  %s2510 = smov 3
  %v2511 = vld [vmem:[%s2509] ss:$16 sm:%s2510]
  %s2512 = scalar_lea.vmem %s0, 769
  %s2513 = smov 12
  %v2514 = vld [vmem:[%s2512] ss:$16 sm:%s2513]
  %vm2515 = vcmask 1043458
  %v2516 = vsel %vm2515, %v2514, %v2511
  %s2517 = scalar_lea.vmem %s0, 769
  %s2518 = smov 48
  %v2519 = vld [vmem:[%s2517] ss:$16 sm:%s2518]
  %vm2520 = vcmask 1045508
  %v2521 = vsel %vm2520, %v2519, %v2516
  %s2522 = scalar_lea.vmem %s0, 769
  %s2523 = smov 192
  %v2524 = vld [vmem:[%s2522] ss:$16 sm:%s2523]
  %vm2525 = vcmask 1047558
  %v2526 = vsel %vm2525, %v2524, %v2521
  %2527 = vrot.lane.b32.xlu0 %v2526, 16
  %v2528 = vpop.permute.xlu0 %2527
  %vm2529 = vcmask 261248
  %s2530 = scalar_lea.vmem %s1, 96
  %2531 = vst.msk [vmem:[%s2530] sm:$0xff] %vm2529, %v2528
  %s2532 = scalar_lea.vmem %s0, 9
  %s2533 = smov 3
  %v2534 = vld [vmem:[%s2532] ss:$16 sm:%s2533]
  %s2535 = scalar_lea.vmem %s0, 9
  %s2536 = smov 12
  %v2537 = vld [vmem:[%s2535] ss:$16 sm:%s2536]
  %vm2538 = vcmask 1043458
  %v2539 = vsel %vm2538, %v2537, %v2534
  %s2540 = scalar_lea.vmem %s0, 9
  %s2541 = smov 48
  %v2542 = vld [vmem:[%s2540] ss:$16 sm:%s2541]
  %vm2543 = vcmask 1045508
  %v2544 = vsel %vm2543, %v2542, %v2539
  %s2545 = scalar_lea.vmem %s0, 9
  %s2546 = smov 192
  %v2547 = vld [vmem:[%s2545] ss:$16 sm:%s2546]
  %vm2548 = vcmask 1047558
  %v2549 = vsel %vm2548, %v2547, %v2544
  %2550 = vrot.lane.b32.xlu0 %v2549, 16
  %v2551 = vpop.permute.xlu0 %2550
  %vm2552 = vcmask 261248
  %s2553 = scalar_lea.vmem %s1, 8
  %2554 = vst.msk [vmem:[%s2553] sm:$0xff] %vm2552, %v2551
  %s2555 = scalar_lea.vmem %s0, 265
  %s2556 = smov 3
  %v2557 = vld [vmem:[%s2555] ss:$16 sm:%s2556]
  %s2558 = scalar_lea.vmem %s0, 265
  %s2559 = smov 12
  %v2560 = vld [vmem:[%s2558] ss:$16 sm:%s2559]
  %vm2561 = vcmask 1043458
  %v2562 = vsel %vm2561, %v2560, %v2557
  %s2563 = scalar_lea.vmem %s0, 265
  %s2564 = smov 48
  %v2565 = vld [vmem:[%s2563] ss:$16 sm:%s2564]
  %vm2566 = vcmask 1045508
  %v2567 = vsel %vm2566, %v2565, %v2562
  %s2568 = scalar_lea.vmem %s0, 265
  %s2569 = smov 192
  %v2570 = vld [vmem:[%s2568] ss:$16 sm:%s2569]
  %vm2571 = vcmask 1047558
  %v2572 = vsel %vm2571, %v2570, %v2567
  %2573 = vrot.lane.b32.xlu0 %v2572, 16
  %v2574 = vpop.permute.xlu0 %2573
  %vm2575 = vcmask 261248
  %s2576 = scalar_lea.vmem %s1, 40
  %2577 = vst.msk [vmem:[%s2576] sm:$0xff] %vm2575, %v2574
  %s2578 = scalar_lea.vmem %s0, 521
  %s2579 = smov 3
  %v2580 = vld [vmem:[%s2578] ss:$16 sm:%s2579]
  %s2581 = scalar_lea.vmem %s0, 521
  %s2582 = smov 12
  %v2583 = vld [vmem:[%s2581] ss:$16 sm:%s2582]
  %vm2584 = vcmask 1043458
  %v2585 = vsel %vm2584, %v2583, %v2580
  %s2586 = scalar_lea.vmem %s0, 521
  %s2587 = smov 48
  %v2588 = vld [vmem:[%s2586] ss:$16 sm:%s2587]
  %vm2589 = vcmask 1045508
  %v2590 = vsel %vm2589, %v2588, %v2585
  %s2591 = scalar_lea.vmem %s0, 521
  %s2592 = smov 192
  %v2593 = vld [vmem:[%s2591] ss:$16 sm:%s2592]
  %vm2594 = vcmask 1047558
  %v2595 = vsel %vm2594, %v2593, %v2590
  %2596 = vrot.lane.b32.xlu0 %v2595, 16
  %v2597 = vpop.permute.xlu0 %2596
  %vm2598 = vcmask 261248
  %s2599 = scalar_lea.vmem %s1, 72
  %2600 = vst.msk [vmem:[%s2599] sm:$0xff] %vm2598, %v2597
  %s2601 = scalar_lea.vmem %s0, 777
  %s2602 = smov 3
  %v2603 = vld [vmem:[%s2601] ss:$16 sm:%s2602]
  %s2604 = scalar_lea.vmem %s0, 777
  %s2605 = smov 12
  %v2606 = vld [vmem:[%s2604] ss:$16 sm:%s2605]
  %vm2607 = vcmask 1043458
  %v2608 = vsel %vm2607, %v2606, %v2603
  %s2609 = scalar_lea.vmem %s0, 777
  %s2610 = smov 48
  %v2611 = vld [vmem:[%s2609] ss:$16 sm:%s2610]
  %vm2612 = vcmask 1045508
  %v2613 = vsel %vm2612, %v2611, %v2608
  %s2614 = scalar_lea.vmem %s0, 777
  %s2615 = smov 192
  %v2616 = vld [vmem:[%s2614] ss:$16 sm:%s2615]
  %vm2617 = vcmask 1047558
  %v2618 = vsel %vm2617, %v2616, %v2613
  %2619 = vrot.lane.b32.xlu0 %v2618, 16
  %v2620 = vpop.permute.xlu0 %2619
  %vm2621 = vcmask 261248
  %s2622 = scalar_lea.vmem %s1, 104
  %2623 = vst.msk [vmem:[%s2622] sm:$0xff] %vm2621, %v2620
  %s2624 = scalar_lea.vmem %s0, 129
  %s2625 = smov 3
  %v2626 = vld [vmem:[%s2624] ss:$16 sm:%s2625]
  %s2627 = scalar_lea.vmem %s0, 129
  %s2628 = smov 12
  %v2629 = vld [vmem:[%s2627] ss:$16 sm:%s2628]
  %vm2630 = vcmask 1043458
  %v2631 = vsel %vm2630, %v2629, %v2626
  %s2632 = scalar_lea.vmem %s0, 129
  %s2633 = smov 48
  %v2634 = vld [vmem:[%s2632] ss:$16 sm:%s2633]
  %vm2635 = vcmask 1045508
  %v2636 = vsel %vm2635, %v2634, %v2631
  %s2637 = scalar_lea.vmem %s0, 129
  %s2638 = smov 192
  %v2639 = vld [vmem:[%s2637] ss:$16 sm:%s2638]
  %vm2640 = vcmask 1047558
  %v2641 = vsel %vm2640, %v2639, %v2636
  %2642 = vrot.lane.b32.xlu0 %v2641, 16
  %v2643 = vpop.permute.xlu0 %2642
  %vm2644 = vcmask 261248
  %s2645 = scalar_lea.vmem %s1, 16
  %2646 = vst.msk [vmem:[%s2645] sm:$0xff] %vm2644, %v2643
  %s2647 = scalar_lea.vmem %s0, 385
  %s2648 = smov 3
  %v2649 = vld [vmem:[%s2647] ss:$16 sm:%s2648]
  %s2650 = scalar_lea.vmem %s0, 385
  %s2651 = smov 12
  %v2652 = vld [vmem:[%s2650] ss:$16 sm:%s2651]
  %vm2653 = vcmask 1043458
  %v2654 = vsel %vm2653, %v2652, %v2649
  %s2655 = scalar_lea.vmem %s0, 385
  %s2656 = smov 48
  %v2657 = vld [vmem:[%s2655] ss:$16 sm:%s2656]
  %vm2658 = vcmask 1045508
  %v2659 = vsel %vm2658, %v2657, %v2654
  %s2660 = scalar_lea.vmem %s0, 385
  %s2661 = smov 192
  %v2662 = vld [vmem:[%s2660] ss:$16 sm:%s2661]
  %vm2663 = vcmask 1047558
  %v2664 = vsel %vm2663, %v2662, %v2659
  %2665 = vrot.lane.b32.xlu0 %v2664, 16
  %v2666 = vpop.permute.xlu0 %2665
  %vm2667 = vcmask 261248
  %s2668 = scalar_lea.vmem %s1, 48
  %2669 = vst.msk [vmem:[%s2668] sm:$0xff] %vm2667, %v2666
  %s2670 = scalar_lea.vmem %s0, 641
  %s2671 = smov 3
  %v2672 = vld [vmem:[%s2670] ss:$16 sm:%s2671]
  %s2673 = scalar_lea.vmem %s0, 641
  %s2674 = smov 12
  %v2675 = vld [vmem:[%s2673] ss:$16 sm:%s2674]
  %vm2676 = vcmask 1043458
  %v2677 = vsel %vm2676, %v2675, %v2672
  %s2678 = scalar_lea.vmem %s0, 641
  %s2679 = smov 48
  %v2680 = vld [vmem:[%s2678] ss:$16 sm:%s2679]
  %vm2681 = vcmask 1045508
  %v2682 = vsel %vm2681, %v2680, %v2677
  %s2683 = scalar_lea.vmem %s0, 641
  %s2684 = smov 192
  %v2685 = vld [vmem:[%s2683] ss:$16 sm:%s2684]
  %vm2686 = vcmask 1047558
  %v2687 = vsel %vm2686, %v2685, %v2682
  %2688 = vrot.lane.b32.xlu0 %v2687, 16
  %v2689 = vpop.permute.xlu0 %2688
  %vm2690 = vcmask 261248
  %s2691 = scalar_lea.vmem %s1, 80
  %2692 = vst.msk [vmem:[%s2691] sm:$0xff] %vm2690, %v2689
  %s2693 = scalar_lea.vmem %s0, 897
  %s2694 = smov 3
  %v2695 = vld [vmem:[%s2693] ss:$16 sm:%s2694]
  %s2696 = scalar_lea.vmem %s0, 897
  %s2697 = smov 12
  %v2698 = vld [vmem:[%s2696] ss:$16 sm:%s2697]
  %vm2699 = vcmask 1043458
  %v2700 = vsel %vm2699, %v2698, %v2695
  %s2701 = scalar_lea.vmem %s0, 897
  %s2702 = smov 48
  %v2703 = vld [vmem:[%s2701] ss:$16 sm:%s2702]
  %vm2704 = vcmask 1045508
  %v2705 = vsel %vm2704, %v2703, %v2700
  %s2706 = scalar_lea.vmem %s0, 897
  %s2707 = smov 192
  %v2708 = vld [vmem:[%s2706] ss:$16 sm:%s2707]
  %vm2709 = vcmask 1047558
  %v2710 = vsel %vm2709, %v2708, %v2705
  %2711 = vrot.lane.b32.xlu0 %v2710, 16
  %v2712 = vpop.permute.xlu0 %2711
  %vm2713 = vcmask 261248
  %s2714 = scalar_lea.vmem %s1, 112
  %2715 = vst.msk [vmem:[%s2714] sm:$0xff] %vm2713, %v2712
  %s2716 = scalar_lea.vmem %s0, 137
  %s2717 = smov 3
  %v2718 = vld [vmem:[%s2716] ss:$16 sm:%s2717]
  %s2719 = scalar_lea.vmem %s0, 137
  %s2720 = smov 12
  %v2721 = vld [vmem:[%s2719] ss:$16 sm:%s2720]
  %vm2722 = vcmask 1043458
  %v2723 = vsel %vm2722, %v2721, %v2718
  %s2724 = scalar_lea.vmem %s0, 137
  %s2725 = smov 48
  %v2726 = vld [vmem:[%s2724] ss:$16 sm:%s2725]
  %vm2727 = vcmask 1045508
  %v2728 = vsel %vm2727, %v2726, %v2723
  %s2729 = scalar_lea.vmem %s0, 137
  %s2730 = smov 192
  %v2731 = vld [vmem:[%s2729] ss:$16 sm:%s2730]
  %vm2732 = vcmask 1047558
  %v2733 = vsel %vm2732, %v2731, %v2728
  %2734 = vrot.lane.b32.xlu0 %v2733, 16
  %v2735 = vpop.permute.xlu0 %2734
  %vm2736 = vcmask 261248
  %s2737 = scalar_lea.vmem %s1, 24
  %2738 = vst.msk [vmem:[%s2737] sm:$0xff] %vm2736, %v2735
  %s2739 = scalar_lea.vmem %s0, 393
  %s2740 = smov 3
  %v2741 = vld [vmem:[%s2739] ss:$16 sm:%s2740]
  %s2742 = scalar_lea.vmem %s0, 393
  %s2743 = smov 12
  %v2744 = vld [vmem:[%s2742] ss:$16 sm:%s2743]
  %vm2745 = vcmask 1043458
  %v2746 = vsel %vm2745, %v2744, %v2741
  %s2747 = scalar_lea.vmem %s0, 393
  %s2748 = smov 48
  %v2749 = vld [vmem:[%s2747] ss:$16 sm:%s2748]
  %vm2750 = vcmask 1045508
  %v2751 = vsel %vm2750, %v2749, %v2746
  %s2752 = scalar_lea.vmem %s0, 393
  %s2753 = smov 192
  %v2754 = vld [vmem:[%s2752] ss:$16 sm:%s2753]
  %vm2755 = vcmask 1047558
  %v2756 = vsel %vm2755, %v2754, %v2751
  %2757 = vrot.lane.b32.xlu0 %v2756, 16
  %v2758 = vpop.permute.xlu0 %2757
  %vm2759 = vcmask 261248
  %s2760 = scalar_lea.vmem %s1, 56
  %2761 = vst.msk [vmem:[%s2760] sm:$0xff] %vm2759, %v2758
  %s2762 = scalar_lea.vmem %s0, 649
  %s2763 = smov 3
  %v2764 = vld [vmem:[%s2762] ss:$16 sm:%s2763]
  %s2765 = scalar_lea.vmem %s0, 649
  %s2766 = smov 12
  %v2767 = vld [vmem:[%s2765] ss:$16 sm:%s2766]
  %vm2768 = vcmask 1043458
  %v2769 = vsel %vm2768, %v2767, %v2764
  %s2770 = scalar_lea.vmem %s0, 649
  %s2771 = smov 48
  %v2772 = vld [vmem:[%s2770] ss:$16 sm:%s2771]
  %vm2773 = vcmask 1045508
  %v2774 = vsel %vm2773, %v2772, %v2769
  %s2775 = scalar_lea.vmem %s0, 649
  %s2776 = smov 192
  %v2777 = vld [vmem:[%s2775] ss:$16 sm:%s2776]
  %vm2778 = vcmask 1047558
  %v2779 = vsel %vm2778, %v2777, %v2774
  %2780 = vrot.lane.b32.xlu0 %v2779, 16
  %v2781 = vpop.permute.xlu0 %2780
  %vm2782 = vcmask 261248
  %s2783 = scalar_lea.vmem %s1, 88
  %2784 = vst.msk [vmem:[%s2783] sm:$0xff] %vm2782, %v2781
  %s2785 = scalar_lea.vmem %s0, 905
  %s2786 = smov 3
  %v2787 = vld [vmem:[%s2785] ss:$16 sm:%s2786]
  %s2788 = scalar_lea.vmem %s0, 905
  %s2789 = smov 12
  %v2790 = vld [vmem:[%s2788] ss:$16 sm:%s2789]
  %vm2791 = vcmask 1043458
  %v2792 = vsel %vm2791, %v2790, %v2787
  %s2793 = scalar_lea.vmem %s0, 905
  %s2794 = smov 48
  %v2795 = vld [vmem:[%s2793] ss:$16 sm:%s2794]
  %vm2796 = vcmask 1045508
  %v2797 = vsel %vm2796, %v2795, %v2792
  %s2798 = scalar_lea.vmem %s0, 905
  %s2799 = smov 192
  %v2800 = vld [vmem:[%s2798] ss:$16 sm:%s2799]
  %vm2801 = vcmask 1047558
  %v2802 = vsel %vm2801, %v2800, %v2797
  %2803 = vrot.lane.b32.xlu0 %v2802, 16
  %v2804 = vpop.permute.xlu0 %2803
  %vm2805 = vcmask 261248
  %s2806 = scalar_lea.vmem %s1, 120
  %2807 = vst.msk [vmem:[%s2806] sm:$0xff] %vm2805, %v2804

// kernel: se_layer.1
$region0: #{se_layer.1}
  #allocation0 [shape = 'u32[]', space=smem, size = 0x4, offset = 0x4, fixed_abs, tag = 'smem constant byte address 0x4 - core index']
  #allocation1 [shape = 'u32[72,128]{1,0:T(1,128)}', space=vmem, size = 0x9000, scoped, tag = 'internal scratch']
  %s0 = inlined_call_operand.vmem [shape: f32[64,256], index: 0, kind: input, shape index: {}, may-alias: {0,3}]
  %s1 = inlined_call_operand.vmem [shape: f32[4,64], index: 1, kind: input, shape index: {}]
  %s2 = inlined_call_operand.vmem [shape: f32[64,4], index: 2, kind: input, shape index: {}]
  %s3 = inlined_call_operand.vmem [shape: f32[64,256], index: 3, kind: output, shape index: {}, may-alias: {0,3}]
  %s4 = sld [smem:[#allocation0]]
  $region22: #{se_layer.1} parent=0
    _
  %s6 = ssub.s32 1, %s4
  %s7 = scalar_select 0, %s6, %s4
  // Predicated region
  $region2: #{se_layer.1} parent=0 // pred_check
    _
  $region3: #{se_layer.1} parent=0 // pred_check_branch
    %9 = sbr.rel (0) target = $region5
  $region4: #{se_layer.1} parent=0 // pred_region
    _
  $region5: #{se_layer.1} parent=0 // pred_fallthru
    _
  // Predicated region
  $region6: #{se_layer.1} parent=0 // pred_check
    _
  $region7: #{se_layer.1} parent=0 // pred_check_branch
    %11 = sbr.rel (0) target = $region9
  $region8: #{se_layer.1} parent=0 // pred_region
    _
  $region9: #{se_layer.1} parent=0 // pred_fallthru
    _
  // Predicated region
  $region10: #{se_layer.1} parent=0 // pred_check
    _
  $region11: #{se_layer.1} parent=0 // pred_check_branch
    %13 = sbr.rel (0) target = $region13
  $region12: #{se_layer.1} parent=0 // pred_region
    _
  $region13: #{se_layer.1} parent=0 // pred_fallthru
    _
  %v14 = vld [vmem:[%s0] sm:$0xff]
  %v15 = vld [vmem:[%s0 + $0x8] sm:$0xff]
  %v16 = vld [vmem:[%s0 + $0x10] sm:$0xff]
  %v17 = vld [vmem:[%s0 + $0x18] sm:$0xff]
  %v18 = vld [vmem:[%s0 + $0x20] sm:$0xff]
  %v19 = vld [vmem:[%s0 + $0x28] sm:$0xff]
  %v20 = vld [vmem:[%s0 + $0x30] sm:$0xff]
  %v21 = vld [vmem:[%s0 + $0x38] sm:$0xff]
  %v22 = vld [vmem:[%s0 + $0x40] sm:$0xff]
  %v23 = vld [vmem:[%s0 + $0x48] sm:$0xff]
  %v24 = vld [vmem:[%s0 + $0x50] sm:$0xff]
  %v25 = vld [vmem:[%s0 + $0x58] sm:$0xff]
  %v26 = vld [vmem:[%s0 + $0x60] sm:$0xff]
  %v27 = vld [vmem:[%s0 + $0x68] sm:$0xff]
  %v28 = vld [vmem:[%s0 + $0x70] sm:$0xff]
  %v29 = vld [vmem:[%s0 + $0x78] sm:$0xff]
  %v30 = vadd.f32 %v14, %v15
  %31 = vadd.xlane.f32.xlu0 %v30
  %v32 = vpop.xlane.xlu0 %31
  %v33 = vadd.f32 %v16, %v17
  %34 = vadd.xlane.f32.xlu0 %v33
  %v35 = vpop.xlane.xlu0 %34
  %v36 = vadd.f32 %v18, %v19
  %37 = vadd.xlane.f32.xlu0 %v36
  %v38 = vpop.xlane.xlu0 %37
  %v39 = vadd.f32 %v20, %v21
  %40 = vadd.xlane.f32.xlu0 %v39
  %v41 = vpop.xlane.xlu0 %40
  %v42 = vadd.f32 %v22, %v23
  %43 = vadd.xlane.f32.xlu0 %v42
  %v44 = vpop.xlane.xlu0 %43
  %v45 = vadd.f32 %v24, %v25
  %46 = vadd.xlane.f32.xlu0 %v45
  %v47 = vpop.xlane.xlu0 %46
  %v48 = vadd.f32 %v26, %v27
  %49 = vadd.xlane.f32.xlu0 %v48
  %v50 = vpop.xlane.xlu0 %49
  %v51 = vadd.f32 %v28, %v29
  %52 = vadd.xlane.f32.xlu0 %v51
  %v53 = vpop.xlane.xlu0 %52
  %v54 = vrcp.pop 256.0
  %v55 = vmul.f32 256.0, %v54
  %v56 = vsub.f32 1.0, %v55
  %v57 = vmul.f32 %v54, %v56
  %v58 = vadd.f32 %v54, %v57
  %vm59 = vweird.f32 %v54
  %v60 = vsel %vm59, %v54, %v58
  %v61 = vmul.f32 %v32, %v60
  %v62 = vmul.f32 %v35, %v60
  %v63 = vmul.f32 %v38, %v60
  %v64 = vmul.f32 %v41, %v60
  %v65 = vmul.f32 %v44, %v60
  %v66 = vmul.f32 %v47, %v60
  %v67 = vmul.f32 %v50, %v60
  %v68 = vmul.f32 %v53, %v60
  %v69 = vld [vmem:[%s1] sm:$0xf]
  %vm70 = vcmask 523264
  %v72 = vsel %vm70, %v69, 0
  %74 = vmatpush.msra.mxu0 0.0
  %75 = vmatpush.msra.mxu0 0.0
  %76 = vmatpush.msra.mxu0 0.0
  %77 = vmatpush.msra.mxu0 0.0
  %78 = vmatpush.msra.mxu0 0.0
  %79 = vmatpush.msra.mxu0 0.0
  %80 = vmatpush.msra.mxu0 0.0
  %81 = vmatpush.msra.mxu0 0.0
  %82 = vmatpush.msra.mxu0 %v68
  %83 = vmatpush.msra.mxu0 %v67
  %84 = vmatpush.msra.mxu0 %v66
  %85 = vmatpush.msra.mxu0 %v65
  %86 = vmatpush.msra.mxu0 %v64
  %87 = vmatpush.msra.mxu0 %v63
  %88 = vmatpush.msra.mxu0 %v62
  %89 = vmatpush.msra.mxu0 %v61
  %90 = vmatmul.f32.gmra.mxu0 %v72
  %v91 = vpop.f32.mrf.mxu0
  %v92 = vadd.f32 0.0, %v91
  %93 = vdwg.mxu0
  %v94 = vmax.f32 %v92, 0.0
  %v95 = vld [vmem:[%s2] sm:$0xff]
  %v96 = vld [vmem:[%s2 + $0x8] sm:$0xff]
  %v97 = vld [vmem:[%s2 + $0x10] sm:$0xff]
  %v98 = vld [vmem:[%s2 + $0x18] sm:$0xff]
  %v99 = vld [vmem:[%s2 + $0x20] sm:$0xff]
  %v100 = vld [vmem:[%s2 + $0x28] sm:$0xff]
  %v101 = vld [vmem:[%s2 + $0x30] sm:$0xff]
  %v102 = vld [vmem:[%s2 + $0x38] sm:$0xff]
  %vm103 = vcmask 31744
  %v105 = vsel %vm103, %v95, 0
  %v108 = vsel %vm103, %v96, 0
  %v111 = vsel %vm103, %v97, 0
  %v114 = vsel %vm103, %v98, 0
  %v117 = vsel %vm103, %v99, 0
  %v120 = vsel %vm103, %v100, 0
  %v123 = vsel %vm103, %v101, 0
  %v126 = vsel %vm103, %v102, 0
  %vm128 = vcmask 1043456
  %v130 = vsel %vm128, %v94, 0
  %132 = vmatpush.msra.mxu0 0.0
  %133 = vmatpush.msra.mxu0 0.0
  %134 = vmatpush.msra.mxu0 0.0
  %135 = vmatpush.msra.mxu0 0.0
  %136 = vmatpush.msra.mxu0 0.0
  %137 = vmatpush.msra.mxu0 0.0
  %138 = vmatpush.msra.mxu0 0.0
  %139 = vmatpush.msra.mxu0 0.0
  %140 = vmatpush.msra.mxu0 0.0
  %141 = vmatpush.msra.mxu0 0.0
  %142 = vmatpush.msra.mxu0 0.0
  %143 = vmatpush.msra.mxu0 0.0
  %144 = vmatpush.msra.mxu0 0.0
  %145 = vmatpush.msra.mxu0 0.0
  %146 = vmatpush.msra.mxu0 0.0
  %147 = vmatpush.msra.mxu0 %v130
  %148 = vmatmul.f32.gmra.mxu0 %v105
  %v149 = vpop.f32.mrf.mxu0
  %v150 = vadd.f32 0.0, %v149
  %151 = vmatmul.f32.gmra.mxu0 %v108
  %v152 = vpop.f32.mrf.mxu0
  %v153 = vadd.f32 0.0, %v152
  %154 = vmatmul.f32.gmra.mxu0 %v111
  %v155 = vpop.f32.mrf.mxu0
  %v156 = vadd.f32 0.0, %v155
  %157 = vmatmul.f32.gmra.mxu0 %v114
  %v158 = vpop.f32.mrf.mxu0
  %v159 = vadd.f32 0.0, %v158
  %160 = vmatmul.f32.gmra.mxu0 %v117
  %v161 = vpop.f32.mrf.mxu0
  %v162 = vadd.f32 0.0, %v161
  %163 = vmatmul.f32.gmra.mxu0 %v120
  %v164 = vpop.f32.mrf.mxu0
  %v165 = vadd.f32 0.0, %v164
  %166 = vmatmul.f32.gmra.mxu0 %v123
  %v167 = vpop.f32.mrf.mxu0
  %v168 = vadd.f32 0.0, %v167
  %169 = vmatmul.f32.gmra.mxu0 %v126
  %v170 = vpop.f32.mrf.mxu0
  %v171 = vadd.f32 0.0, %v170
  %172 = vdwg.mxu0
  %v173 = vsub.f32 0.0, %v150
  %v174 = vsub.f32 0.0, %v153
  %v175 = vsub.f32 0.0, %v156
  %v176 = vsub.f32 0.0, %v159
  %v177 = vsub.f32 0.0, %v162
  %v178 = vsub.f32 0.0, %v165
  %v179 = vsub.f32 0.0, %v168
  %v180 = vsub.f32 0.0, %v171
  %v181 = vmul.f32 %v173, 1.442695
  %v182 = vpow.pop %v181
  %v183 = vmul.f32 %v174, 1.442695
  %v184 = vpow.pop %v183
  %v185 = vmul.f32 %v175, 1.442695
  %v186 = vpow.pop %v185
  %v187 = vmul.f32 %v176, 1.442695
  %v188 = vpow.pop %v187
  %v189 = vmul.f32 %v177, 1.442695
  %v190 = vpow.pop %v189
  %v191 = vmul.f32 %v178, 1.442695
  %v192 = vpow.pop %v191
  %v193 = vmul.f32 %v179, 1.442695
  %v194 = vpow.pop %v193
  %v195 = vmul.f32 %v180, 1.442695
  %v196 = vpow.pop %v195
  %v197 = vadd.f32 %v182, 1.0
  %v198 = vadd.f32 %v184, 1.0
  %v199 = vadd.f32 %v186, 1.0
  %v200 = vadd.f32 %v188, 1.0
  %v201 = vadd.f32 %v190, 1.0
  %v202 = vadd.f32 %v192, 1.0
  %v203 = vadd.f32 %v194, 1.0
  %v204 = vadd.f32 %v196, 1.0
  %v205 = vrcp.pop %v197
  %v206 = vmul.f32 %v197, %v205
  %v207 = vsub.f32 1.0, %v206
  %v208 = vmul.f32 %v205, %v207
  %v209 = vadd.f32 %v205, %v208
  %vm210 = vweird.f32 %v197
  %vm211 = vweird.f32 %v205
  %vm212 = vmor %vm210, %vm211
  %v213 = vsel %vm212, %v205, %v209
  %v214 = vand.u32 2147483647, %v197
  %vm215 = vcmp.eq.f32.partialorder %v214, 8.507059e+37
  %v216 = vand.u32 %v197, 2147483648
  %v217 = vor.u32 1.1754944e-38, %v216
  %v218 = vsel %vm215, %v217, %v213
  %v219 = vmul.f32 1.0, %v218
  %v220 = vrcp.pop %v198
  %v221 = vmul.f32 %v198, %v220
  %v222 = vsub.f32 1.0, %v221
  %v223 = vmul.f32 %v220, %v222
  %v224 = vadd.f32 %v220, %v223
  %vm225 = vweird.f32 %v198
  %vm226 = vweird.f32 %v220
  %vm227 = vmor %vm225, %vm226
  %v228 = vsel %vm227, %v220, %v224
  %v229 = vand.u32 2147483647, %v198
  %vm230 = vcmp.eq.f32.partialorder %v229, 8.507059e+37
  %v231 = vand.u32 %v198, 2147483648
  %v232 = vor.u32 1.1754944e-38, %v231
  %v233 = vsel %vm230, %v232, %v228
  %v234 = vmul.f32 1.0, %v233
  %v235 = vrcp.pop %v199
  %v236 = vmul.f32 %v199, %v235
  %v237 = vsub.f32 1.0, %v236
  %v238 = vmul.f32 %v235, %v237
  %v239 = vadd.f32 %v235, %v238
  %vm240 = vweird.f32 %v199
  %vm241 = vweird.f32 %v235
  %vm242 = vmor %vm240, %vm241
  %v243 = vsel %vm242, %v235, %v239
  %v244 = vand.u32 2147483647, %v199
  %vm245 = vcmp.eq.f32.partialorder %v244, 8.507059e+37
  %v246 = vand.u32 %v199, 2147483648
  %v247 = vor.u32 1.1754944e-38, %v246
  %v248 = vsel %vm245, %v247, %v243
  %v249 = vmul.f32 1.0, %v248
  %v250 = vrcp.pop %v200
  %v251 = vmul.f32 %v200, %v250
  %v252 = vsub.f32 1.0, %v251
  %v253 = vmul.f32 %v250, %v252
  %v254 = vadd.f32 %v250, %v253
  %vm255 = vweird.f32 %v200
  %vm256 = vweird.f32 %v250
  %vm257 = vmor %vm255, %vm256
  %v258 = vsel %vm257, %v250, %v254
  %v259 = vand.u32 2147483647, %v200
  %vm260 = vcmp.eq.f32.partialorder %v259, 8.507059e+37
  %v261 = vand.u32 %v200, 2147483648
  %v262 = vor.u32 1.1754944e-38, %v261
  %v263 = vsel %vm260, %v262, %v258
  %v264 = vmul.f32 1.0, %v263
  %v265 = vrcp.pop %v201
  %v266 = vmul.f32 %v201, %v265
  %v267 = vsub.f32 1.0, %v266
  %v268 = vmul.f32 %v265, %v267
  %v269 = vadd.f32 %v265, %v268
  %vm270 = vweird.f32 %v201
  %vm271 = vweird.f32 %v265
  %vm272 = vmor %vm270, %vm271
  %v273 = vsel %vm272, %v265, %v269
  %v274 = vand.u32 2147483647, %v201
  %vm275 = vcmp.eq.f32.partialorder %v274, 8.507059e+37
  %v276 = vand.u32 %v201, 2147483648
  %v277 = vor.u32 1.1754944e-38, %v276
  %v278 = vsel %vm275, %v277, %v273
  %v279 = vmul.f32 1.0, %v278
  %v280 = vrcp.pop %v202
  %v281 = vmul.f32 %v202, %v280
  %v282 = vsub.f32 1.0, %v281
  %v283 = vmul.f32 %v280, %v282
  %v284 = vadd.f32 %v280, %v283
  %vm285 = vweird.f32 %v202
  %vm286 = vweird.f32 %v280
  %vm287 = vmor %vm285, %vm286
  %v288 = vsel %vm287, %v280, %v284
  %v289 = vand.u32 2147483647, %v202
  %vm290 = vcmp.eq.f32.partialorder %v289, 8.507059e+37
  %v291 = vand.u32 %v202, 2147483648
  %v292 = vor.u32 1.1754944e-38, %v291
  %v293 = vsel %vm290, %v292, %v288
  %v294 = vmul.f32 1.0, %v293
  %v295 = vrcp.pop %v203
  %v296 = vmul.f32 %v203, %v295
  %v297 = vsub.f32 1.0, %v296
  %v298 = vmul.f32 %v295, %v297
  %v299 = vadd.f32 %v295, %v298
  %vm300 = vweird.f32 %v203
  %vm301 = vweird.f32 %v295
  %vm302 = vmor %vm300, %vm301
  %v303 = vsel %vm302, %v295, %v299
  %v304 = vand.u32 2147483647, %v203
  %vm305 = vcmp.eq.f32.partialorder %v304, 8.507059e+37
  %v306 = vand.u32 %v203, 2147483648
  %v307 = vor.u32 1.1754944e-38, %v306
  %v308 = vsel %vm305, %v307, %v303
  %v309 = vmul.f32 1.0, %v308
  %v310 = vrcp.pop %v204
  %v311 = vmul.f32 %v204, %v310
  %v312 = vsub.f32 1.0, %v311
  %v313 = vmul.f32 %v310, %v312
  %v314 = vadd.f32 %v310, %v313
  %vm315 = vweird.f32 %v204
  %vm316 = vweird.f32 %v310
  %vm317 = vmor %vm315, %vm316
  %v318 = vsel %vm317, %v310, %v314
  %v319 = vand.u32 2147483647, %v204
  %vm320 = vcmp.eq.f32.partialorder %v319, 8.507059e+37
  %v321 = vand.u32 %v204, 2147483648
  %v322 = vor.u32 1.1754944e-38, %v321
  %v323 = vsel %vm320, %v322, %v318
  %v324 = vmul.f32 1.0, %v323
  %326 = vset.pattern.permute.xlu0 0
  %327 = vperm.xlu0 %326, %v219
  %v328 = vpop.permute.xlu0 %327
  %331 = vset.pattern.permute.xlu0 0
  %332 = vperm.xlu0 %331, %v234
  %v333 = vpop.permute.xlu0 %332
  %336 = vset.pattern.permute.xlu0 0
  %337 = vperm.xlu0 %336, %v249
  %v338 = vpop.permute.xlu0 %337
  %341 = vset.pattern.permute.xlu0 0
  %342 = vperm.xlu0 %341, %v264
  %v343 = vpop.permute.xlu0 %342
  %346 = vset.pattern.permute.xlu0 0
  %347 = vperm.xlu0 %346, %v279
  %v348 = vpop.permute.xlu0 %347
  %351 = vset.pattern.permute.xlu0 0
  %352 = vperm.xlu0 %351, %v294
  %v353 = vpop.permute.xlu0 %352
  %356 = vset.pattern.permute.xlu0 0
  %357 = vperm.xlu0 %356, %v309
  %v358 = vpop.permute.xlu0 %357
  %361 = vset.pattern.permute.xlu0 0
  %362 = vperm.xlu0 %361, %v324
  %v363 = vpop.permute.xlu0 %362
  %v365 = vmul.f32 %v14, %v328
  %v366 = vmul.f32 %v15, %v328
  %v367 = vmul.f32 %v16, %v333
  %v368 = vmul.f32 %v17, %v333
  %v369 = vmul.f32 %v18, %v338
  %v370 = vmul.f32 %v19, %v338
  %v371 = vmul.f32 %v20, %v343
  %v372 = vmul.f32 %v21, %v343
  %v373 = vmul.f32 %v22, %v348
  %v374 = vmul.f32 %v23, %v348
  %v375 = vmul.f32 %v24, %v353
  %v376 = vmul.f32 %v25, %v353
  %v377 = vmul.f32 %v26, %v358
  %v378 = vmul.f32 %v27, %v358
  %v379 = vmul.f32 %v28, %v363
  %v380 = vmul.f32 %v29, %v363
  %381 = vst [vmem:[%s3] sm:$0xff] %v365
  %382 = vst [vmem:[%s3 + $0x8] sm:$0xff] %v366
  %383 = vst [vmem:[%s3 + $0x10] sm:$0xff] %v367
  %384 = vst [vmem:[%s3 + $0x18] sm:$0xff] %v368
  %385 = vst [vmem:[%s3 + $0x20] sm:$0xff] %v369
  %386 = vst [vmem:[%s3 + $0x28] sm:$0xff] %v370
  %387 = vst [vmem:[%s3 + $0x30] sm:$0xff] %v371
  %388 = vst [vmem:[%s3 + $0x38] sm:$0xff] %v372
  %389 = vst [vmem:[%s3 + $0x40] sm:$0xff] %v373
  %390 = vst [vmem:[%s3 + $0x48] sm:$0xff] %v374
  %391 = vst [vmem:[%s3 + $0x50] sm:$0xff] %v375
  %392 = vst [vmem:[%s3 + $0x58] sm:$0xff] %v376
  %393 = vst [vmem:[%s3 + $0x60] sm:$0xff] %v377
  %394 = vst [vmem:[%s3 + $0x68] sm:$0xff] %v378
  %395 = vst [vmem:[%s3 + $0x70] sm:$0xff] %v379
  %396 = vst [vmem:[%s3 + $0x78] sm:$0xff] %v380
  // Predicated region
  $region14: #{se_layer.1} parent=0 // pred_check
    _
  $region15: #{se_layer.1} parent=0 // pred_check_branch
    %398 = sbr.rel (0) target = $region17
  $region16: #{se_layer.1} parent=0 // pred_region
    _
  $region17: #{se_layer.1} parent=0 // pred_fallthru
    _
  // Predicated region
  $region18: #{se_layer.1} parent=0 // pred_check
    _
  $region19: #{se_layer.1} parent=0 // pred_check_branch
    %400 = sbr.rel (0) target = $region21
  $region20: #{se_layer.1} parent=0 // pred_region
    _
  $region21: #{se_layer.1} parent=0 // pred_fallthru
    _

</llo_original>
